<compile_context>
chip_gen: v6e
topology: v6e:2x2x1
jax: 0.10.0
libtpu: 0.0.40
codegen_flags: <defaults>
</compile_context>

<pallas_src>
import functools

import jax
import jax.numpy as jnp
from jax.experimental import pallas as pl
from jax.experimental.pallas import tpu as pltpu

BATCH_SIZE = 8
IN_FEATURES = 1 * 28 * 28   # 784
H1 = 300
H2 = 100
OUT = 10

# lane-/sublane-aligned padded sizes
IN_PAD = 896     # 7 * 128
H1_PAD = 384     # 3 * 128
H2_PAD = 128
OUT_PAD = 128


def _round_up(x, m):
    return ((x + m - 1) // m) * m


def fcnn_kernel(x_ref, w1_ref, b1_ref, w2_ref, b2_ref, w3_ref, b3_ref, o_ref):
    # x_ref: (TB, IN_PAD) bf16; w*: (in_pad, out_pad) bf16; b*: (1, out_pad) f32
    # o_ref: (TB, OUT_PAD) f32 lane-dense slab (valid log-probs in lanes [0, OUT))
    x = x_ref[...]

    # fc1 + ReLU  (bf16 matmul, f32 accumulate)
    h1 = jnp.dot(x, w1_ref[...], preferred_element_type=jnp.float32) + b1_ref[...]
    h1 = jnp.maximum(h1, 0.0).astype(jnp.bfloat16)

    # fc2 + ReLU
    h2 = jnp.dot(h1, w2_ref[...], preferred_element_type=jnp.float32) + b2_ref[...]
    h2 = jnp.maximum(h2, 0.0).astype(jnp.bfloat16)

    # out + masked log_softmax over the first OUT lanes (padded lanes excluded)
    logits = jnp.dot(h2, w3_ref[...], preferred_element_type=jnp.float32) + b3_ref[...]
    lane = jax.lax.broadcasted_iota(jnp.int32, logits.shape, 1)
    valid = lane < OUT
    masked = jnp.where(valid, logits, -jnp.inf)
    m = jnp.max(masked, axis=-1, keepdims=True)
    shifted = masked - m
    lse = jnp.log(jnp.sum(jnp.exp(shifted), axis=-1, keepdims=True))
    o_ref[...] = jnp.where(valid, shifted - lse, 0.0)


@functools.partial(jax.jit, static_argnames=())
def fcnn_forward(x_nchw, params):
    """x_nchw: (B, 1, 28, 28) float32. Returns (B, 10) log-probabilities (f32)."""
    w1, b1, w2, b2, w3, b3 = params   # already padded; weights bf16, biases f32
    B = x_nchw.shape[0]

    # t.view(batch_size, -1), zero-pad features to IN_PAD, cast to bf16
    x = x_nchw.reshape(B, -1)

    # batch tile: multiple of 8 sublanes, capped at 256 rows per grid step
    tb = min(256, _round_up(B, 8))
    b_pad = _round_up(B, tb)
    x = jnp.pad(x, ((0, b_pad - B), (0, IN_PAD - IN_FEATURES))).astype(jnp.bfloat16)

    grid = (b_pad // tb,)

    const = lambda i: (0, 0)           # weights/biases: VMEM-resident across grid
    cost = pl.CostEstimate(
        flops=2 * B * (IN_FEATURES * H1 + H1 * H2 + H2 * OUT),
        transcendentals=B * (OUT_PAD + 1),
        bytes_accessed=(
            2 * (IN_PAD * H1_PAD + H1_PAD * H2_PAD + H2_PAD * OUT_PAD)  # bf16 weights
            + 4 * (H1_PAD + H2_PAD + OUT_PAD)                            # f32 biases
            + 2 * b_pad * IN_PAD                                         # bf16 x
            + 4 * b_pad * OUT_PAD                                        # f32 out
        ),
    )

    out = pl.pallas_call(
        fcnn_kernel,
        out_shape=jax.ShapeDtypeStruct((b_pad, OUT_PAD), jnp.float32),
        grid=grid,
        in_specs=[
            pl.BlockSpec((tb, IN_PAD), lambda i: (i, 0)),
            pl.BlockSpec((IN_PAD, H1_PAD), const),
            pl.BlockSpec((1, H1_PAD), const),
            pl.BlockSpec((H1_PAD, H2_PAD), const),
            pl.BlockSpec((1, H2_PAD), const),
            pl.BlockSpec((H2_PAD, OUT_PAD), const),
            pl.BlockSpec((1, OUT_PAD), const),
        ],
        out_specs=pl.BlockSpec((tb, OUT_PAD), lambda i: (i, 0)),
        compiler_params=pltpu.CompilerParams(
            dimension_semantics=("parallel",),
        ),
        cost_estimate=cost,
    )(x, w1, b1, w2, b2, w3, b3)

    return out[:B, :OUT]


def init_params(key):
    """Deterministic init mimicking nn.Linear default U(-1/sqrt(fan_in), +...).

    Weights are stored (in, out), zero-padded to lane multiples, and cast to
    bf16 ONCE here (halves HBM weight traffic on every forward call). Biases
    stay f32 (tiny). Zero padding keeps the math identical: padded input
    columns hit zero weight rows, padded hidden lanes get relu(0)=0 and feed
    zero weight rows of the next layer, padded output lanes are masked out of
    the log_softmax inside the kernel.
    """
    def linear(key, fan_in, fan_out, in_pad, out_pad):
        kw, kb = jax.random.split(key)
        bound = 1.0 / jnp.sqrt(jnp.float32(fan_in))
        w = jax.random.uniform(kw, (fan_in, fan_out), jnp.float32, -bound, bound)
        b = jax.random.uniform(kb, (1, fan_out), jnp.float32, -bound, bound)
        w = jnp.pad(w, ((0, in_pad - fan_in), (0, out_pad - fan_out)))
        b = jnp.pad(b, ((0, 0), (0, out_pad - fan_out)))
        return w.astype(jnp.bfloat16), b.astype(jnp.float32)

    k1, k2, k3 = jax.random.split(key, 3)
    w1, b1 = linear(k1, IN_FEATURES, H1, IN_PAD, H1_PAD)
    w2, b2 = linear(k2, H1, H2, H1_PAD, H2_PAD)
    w3, b3 = linear(k3, H2, OUT, H2_PAD, OUT_PAD)
    return (w1, b1, w2, b2, w3, b3)


if __name__ == "__main__":
    key = jax.random.PRNGKey(0)
    k_params, k_x = jax.random.split(key)
    params = init_params(k_params)
    x = jax.random.normal(k_x, (BATCH_SIZE, 1, 28, 28), jnp.float32)

    out = fcnn_forward(x, params)
    jax.block_until_ready(out)

    # sanity: log_softmax rows must (almost) sum to 1 in prob space
    probs_sum = jnp.sum(jnp.exp(out), axis=1)
    assert out.shape == (BATCH_SIZE, OUT)
    assert bool(jnp.all(jnp.abs(probs_sum - 1.0) < 1e-4))
    assert bool(jnp.all(jnp.isfinite(out)))

    print("KERNEL_OK")
</pallas_src>

<mosaic_0001>
module attributes {stable_mosaic.version = 11 : i64} {
  func.func @fcnn_kernel(%arg0: i32, %arg1: memref<8x896xbf16, #tpu.memory_space<vmem>>, %arg2: memref<896x384xbf16, #tpu.memory_space<vmem>>, %arg3: memref<1x384xf32, #tpu.memory_space<vmem>>, %arg4: memref<384x128xbf16, #tpu.memory_space<vmem>>, %arg5: memref<1x128xf32, #tpu.memory_space<vmem>>, %arg6: memref<128x128xbf16, #tpu.memory_space<vmem>>, %arg7: memref<1x128xf32, #tpu.memory_space<vmem>>, %arg8: memref<8x128xf32, #tpu.memory_space<vmem>>) attributes {dimension_semantics = [#tpu.dimension_semantics<parallel>], iteration_bounds = array<i64: 1>, scalar_prefetch = 0 : i64, scratch_operands = 0 : i64, tpu.core_type = #tpu.core_type<tc>, window_params = [{transform_indices = @transform_0, window_bounds = array<i64: 8, 896>}, {pipeline_mode = #tpu.pipeline_mode<synchronous>, transform_indices = @transform_1, window_bounds = array<i64: 896, 384>}, {pipeline_mode = #tpu.pipeline_mode<synchronous>, transform_indices = @transform_2, window_bounds = array<i64: 1, 384>}, {pipeline_mode = #tpu.pipeline_mode<synchronous>, transform_indices = @transform_3, window_bounds = array<i64: 384, 128>}, {pipeline_mode = #tpu.pipeline_mode<synchronous>, transform_indices = @transform_4, window_bounds = array<i64: 1, 128>}, {pipeline_mode = #tpu.pipeline_mode<synchronous>, transform_indices = @transform_5, window_bounds = array<i64: 128, 128>}, {pipeline_mode = #tpu.pipeline_mode<synchronous>, transform_indices = @transform_6, window_bounds = array<i64: 1, 128>}, {transform_indices = @transform_7, window_bounds = array<i64: 8, 128>}]} {
    %c0 = arith.constant 0 : index
    %c0_0 = arith.constant 0 : index
    %0 = vector.load %arg1[%c0, %c0_0] : memref<8x896xbf16, #tpu.memory_space<vmem>>, vector<8x896xbf16>
    %c0_1 = arith.constant 0 : index
    %c0_2 = arith.constant 0 : index
    %1 = vector.load %arg2[%c0_1, %c0_2] : memref<896x384xbf16, #tpu.memory_space<vmem>>, vector<896x384xbf16>
    %cst = arith.constant dense<0.000000e+00> : vector<8x384xf32>
    %2 = tpu.matmul %0, %1, %cst {dimension_numbers = #tpu.dot_dimension_numbers<[1], [0], [0], [1], [0, 0, 1, 1], [], []>} : vector<8x896xbf16>, vector<896x384xbf16>, vector<8x384xf32> -> vector<8x384xf32>
    %c0_3 = arith.constant 0 : index
    %c0_4 = arith.constant 0 : index
    %3 = vector.load %arg3[%c0_3, %c0_4] : memref<1x384xf32, #tpu.memory_space<vmem>>, vector<1x384xf32>
    %4 = vector.broadcast %3 : vector<1x384xf32> to vector<8x384xf32>
    %5 = arith.addf %2, %4 : vector<8x384xf32>
    %cst_5 = arith.constant 0.000000e+00 : f32
    %6 = vector.broadcast %cst_5 : f32 to vector<8x384xf32>
    %7 = arith.maximumf %5, %6 : vector<8x384xf32>
    %8 = arith.truncf %7 : vector<8x384xf32> to vector<8x384xbf16>
    %c0_6 = arith.constant 0 : index
    %c0_7 = arith.constant 0 : index
    %9 = vector.load %arg4[%c0_6, %c0_7] : memref<384x128xbf16, #tpu.memory_space<vmem>>, vector<384x128xbf16>
    %cst_8 = arith.constant dense<0.000000e+00> : vector<8x128xf32>
    %10 = tpu.matmul %8, %9, %cst_8 {dimension_numbers = #tpu.dot_dimension_numbers<[1], [0], [0], [1], [0, 0, 1, 1], [], []>} : vector<8x384xbf16>, vector<384x128xbf16>, vector<8x128xf32> -> vector<8x128xf32>
    %c0_9 = arith.constant 0 : index
    %c0_10 = arith.constant 0 : index
    %11 = vector.load %arg5[%c0_9, %c0_10] : memref<1x128xf32, #tpu.memory_space<vmem>>, vector<1x128xf32>
    %12 = vector.broadcast %11 : vector<1x128xf32> to vector<8x128xf32>
    %13 = arith.addf %10, %12 : vector<8x128xf32>
    %cst_11 = arith.constant 0.000000e+00 : f32
    %14 = vector.broadcast %cst_11 : f32 to vector<8x128xf32>
    %15 = arith.maximumf %13, %14 : vector<8x128xf32>
    %16 = arith.truncf %15 : vector<8x128xf32> to vector<8x128xbf16>
    %c0_12 = arith.constant 0 : index
    %c0_13 = arith.constant 0 : index
    %17 = vector.load %arg6[%c0_12, %c0_13] : memref<128x128xbf16, #tpu.memory_space<vmem>>, vector<128x128xbf16>
    %cst_14 = arith.constant dense<0.000000e+00> : vector<8x128xf32>
    %18 = tpu.matmul %16, %17, %cst_14 {dimension_numbers = #tpu.dot_dimension_numbers<[1], [0], [0], [1], [0, 0, 1, 1], [], []>} : vector<8x128xbf16>, vector<128x128xbf16>, vector<8x128xf32> -> vector<8x128xf32>
    %c0_15 = arith.constant 0 : index
    %c0_16 = arith.constant 0 : index
    %19 = vector.load %arg7[%c0_15, %c0_16] : memref<1x128xf32, #tpu.memory_space<vmem>>, vector<1x128xf32>
    %20 = vector.broadcast %19 : vector<1x128xf32> to vector<8x128xf32>
    %21 = arith.addf %18, %20 : vector<8x128xf32>
    %22 = tpu.iota {dimensions = array<i32: 1>} : vector<8x128xi32>
    %c10_i32 = arith.constant 10 : i32
    %23 = vector.broadcast %c10_i32 : i32 to vector<8x128xi32>
    %24 = arith.cmpi slt, %22, %23 : vector<8x128xi32>
    %cst_17 = arith.constant 0xFF800000 : f32
    %25 = vector.broadcast %cst_17 : f32 to vector<8x128xf32>
    %26 = arith.select %24, %21, %25 : vector<8x128xi1>, vector<8x128xf32>
    %cst_18 = arith.constant dense<0xFF800000> : vector<8xf32>
    %27 = vector.multi_reduction <maximumf>, %26, %cst_18 [1] : vector<8x128xf32> to vector<8xf32>
    %28 = vector.shape_cast %27 : vector<8xf32> to vector<8x1xf32>
    %29 = vector.broadcast %28 : vector<8x1xf32> to vector<8x128xf32>
    %30 = arith.subf %26, %29 : vector<8x128xf32>
    %31 = math.exp %30 : vector<8x128xf32>
    %cst_19 = arith.constant dense<0.000000e+00> : vector<8xf32>
    %32 = vector.multi_reduction <add>, %31, %cst_19 [1] : vector<8x128xf32> to vector<8xf32>
    %33 = vector.shape_cast %32 : vector<8xf32> to vector<8x1xf32>
    %34 = math.log %33 : vector<8x1xf32>
    %35 = vector.broadcast %34 : vector<8x1xf32> to vector<8x128xf32>
    %36 = arith.subf %30, %35 : vector<8x128xf32>
    %cst_20 = arith.constant 0.000000e+00 : f32
    %37 = vector.broadcast %cst_20 : f32 to vector<8x128xf32>
    %38 = arith.select %24, %36, %37 : vector<8x128xi1>, vector<8x128xf32>
    %c0_21 = arith.constant 0 : index
    %c0_22 = arith.constant 0 : index
    %39 = vector.load %arg8[%c0_21, %c0_22] : memref<8x128xf32, #tpu.memory_space<vmem>>, vector<8x128xf32>
    tpu.vector_store %arg8[%c0_21, %c0_22], %38 {strides = array<i32>} : memref<8x128xf32, #tpu.memory_space<vmem>>, vector<8x128xf32>,
    return
  }
  func.func @transform_0(%arg0: i32) -> (i32, i32) {
    %c0_i32 = arith.constant 0 : i32
    %c0_i32_0 = arith.constant 0 : i32
    return %arg0, %c0_i32 : i32, i32
  }
  func.func @transform_1(%arg0: i32) -> (i32, i32) {
    %c0_i32 = arith.constant 0 : i32
    %c0_i32_0 = arith.constant 0 : i32
    %c0_i32_1 = arith.constant 0 : i32
    return %c0_i32, %c0_i32_0 : i32, i32
  }
  func.func @transform_2(%arg0: i32) -> (i32, i32) {
    %c0_i32 = arith.constant 0 : i32
    %c0_i32_0 = arith.constant 0 : i32
    %c0_i32_1 = arith.constant 0 : i32
    return %c0_i32, %c0_i32_0 : i32, i32
  }
  func.func @transform_3(%arg0: i32) -> (i32, i32) {
    %c0_i32 = arith.constant 0 : i32
    %c0_i32_0 = arith.constant 0 : i32
    %c0_i32_1 = arith.constant 0 : i32
    return %c0_i32, %c0_i32_0 : i32, i32
  }
  func.func @transform_4(%arg0: i32) -> (i32, i32) {
    %c0_i32 = arith.constant 0 : i32
    %c0_i32_0 = arith.constant 0 : i32
    %c0_i32_1 = arith.constant 0 : i32
    return %c0_i32, %c0_i32_0 : i32, i32
  }
  func.func @transform_5(%arg0: i32) -> (i32, i32) {
    %c0_i32 = arith.constant 0 : i32
    %c0_i32_0 = arith.constant 0 : i32
    %c0_i32_1 = arith.constant 0 : i32
    return %c0_i32, %c0_i32_0 : i32, i32
  }
  func.func @transform_6(%arg0: i32) -> (i32, i32) {
    %c0_i32 = arith.constant 0 : i32
    %c0_i32_0 = arith.constant 0 : i32
    %c0_i32_1 = arith.constant 0 : i32
    return %c0_i32, %c0_i32_0 : i32, i32
  }
  func.func @transform_7(%arg0: i32) -> (i32, i32) {
    %c0_i32 = arith.constant 0 : i32
    %c0_i32_0 = arith.constant 0 : i32
    return %arg0, %c0_i32 : i32, i32
  }
}

</mosaic_0001>

<llo_original>
// kernel: fcnn_forward.1
$region0: #{fcnn_forward.1}
  #allocation0 [shape = 'u32[]', space=smem, size = 0x4, offset = 0x4, fixed_abs, tag = 'smem constant byte address 0x4 - core index']
  #allocation1 [shape = 'u32[144,128]{1,0:T(1,128)}', space=vmem, size = 0x12000, scoped, tag = 'internal scratch']
  %s0 = inlined_call_operand.vmem [shape: bf16[8,896], index: 0, kind: input, shape index: {}]
  %s1 = inlined_call_operand.hbm [shape: bf16[896,384], index: 1, kind: input, shape index: {}]
  %s2 = inlined_call_operand.vmem [shape: f32[1,384], index: 2, kind: input, shape index: {}]
  %s3 = inlined_call_operand.vmem [shape: bf16[384,128], index: 3, kind: input, shape index: {}]
  %s4 = inlined_call_operand.vmem [shape: f32[1,128], index: 4, kind: input, shape index: {}]
  %s5 = inlined_call_operand.vmem [shape: bf16[128,128], index: 5, kind: input, shape index: {}]
  %s6 = inlined_call_operand.vmem [shape: f32[1,128], index: 6, kind: input, shape index: {}]
  %s7 = inlined_call_operand.hbm [shape: f32[8,128], index: 7, kind: output, shape index: {}]
  %s8 = sld [smem:[#allocation0]]
  $region42: #{fcnn_forward.1} parent=0
    _
  %s10 = ssub.s32 1, %s8
  %s11 = scalar_select 0, %s10, %s8
  $region1: #{fcnn_forward.1} parent=0
    #allocation2 [shape = 'u8[688128]{0}', space=vmem, size = 0xa8000, scoped, tag = 'input window, operand 1, single buffered']
    #allocation3 [shape = 's32[1]{0}', space=sflag, size = 0x4, scoped, tag = 'scoped memory for fcnn_forward.1']
    #allocation4 [shape = 's32[1]{0}', space=sflag, size = 0x4, scoped, tag = 'scoped memory for fcnn_forward.1']
    #allocation5 [shape = 'u8[4096]{0}', space=vmem, size = 0x1000, scoped, tag = 'output window, operand 0, single buffered']
    %12 = vsyncpa [#allocation3], 0
    %13 = vsyncpa [#allocation4], 0
    // Predicated region
    $region2: #{fcnn_forward.1} parent=1 // pred_check
      _
    $region3: #{fcnn_forward.1} parent=1 // pred_check_branch
      %15 = sbr.rel (0) target = $region5
    $region4: #{fcnn_forward.1} parent=1 // pred_region
      _
    $region5: #{fcnn_forward.1} parent=1 // pred_fallthru
      _
    // Predicated region
    $region6: #{fcnn_forward.1} parent=1 // pred_check
      _
    $region7: #{fcnn_forward.1} parent=1 // pred_check_branch
      %17 = sbr.rel (0) target = $region9
    $region8: #{fcnn_forward.1} parent=1 // pred_region
      %s19 = ssub.s32 21504, 21504
      %20 = vsyncadd [#allocation3], %s19
      %s21 = sshll.u32 [#allocation2], 4
      %s22 = int_to_ptr.vmem [resolvable:$true] %s21
      %27 = dma.hbm_to_vmem [thread:$0]  %s1, 21504, %s22, [#allocation3], 192, 192, 12
    $region9: #{fcnn_forward.1} parent=1 // pred_fallthru
      _
    // Predicated region
    $region10: #{fcnn_forward.1} parent=1 // pred_check
      _
    $region11: #{fcnn_forward.1} parent=1 // pred_check_branch
      %29 = sbr.rel (0) target = $region13
    $region12: #{fcnn_forward.1} parent=1 // pred_region
      _
    $region13: #{fcnn_forward.1} parent=1 // pred_fallthru
      _
    // Predicated region
    $region14: #{fcnn_forward.1} parent=1 // pred_check
      _
    $region15: #{fcnn_forward.1} parent=1 // pred_check_branch
      %31 = sbr.rel (0) target = $region17
    $region16: #{fcnn_forward.1} parent=1 // pred_region
      _
    $region17: #{fcnn_forward.1} parent=1 // pred_fallthru
      _
    // Predicated region
    $region18: #{fcnn_forward.1} parent=1 // pred_check
      _
    $region19: #{fcnn_forward.1} parent=1 // pred_check_branch
      %33 = sbr.rel (0) target = $region21
    $region20: #{fcnn_forward.1} parent=1 // pred_region
      _
    $region21: #{fcnn_forward.1} parent=1 // pred_fallthru
      _
    // Predicated region
    $region22: #{fcnn_forward.1} parent=1 // pred_check
      _
    $region23: #{fcnn_forward.1} parent=1 // pred_check_branch
      %35 = sbr.rel (0) target = $region25
    $region24: #{fcnn_forward.1} parent=1 // pred_region
      _
    $region25: #{fcnn_forward.1} parent=1 // pred_fallthru
      _
    // Predicated region
    $region26: #{fcnn_forward.1} parent=1 // pred_check
      _
    $region27: #{fcnn_forward.1} parent=1 // pred_check_branch
      %37 = sbr.rel (0) target = $region29
    $region28: #{fcnn_forward.1} parent=1 // pred_region
      _
    $region29: #{fcnn_forward.1} parent=1 // pred_fallthru
      _
    // Predicated region
    $region30: #{fcnn_forward.1} parent=1 // pred_check
      _
    $region31: #{fcnn_forward.1} parent=1 // pred_check_branch
      %39 = sbr.rel (0) target = $region33
    $region32: #{fcnn_forward.1} parent=1 // pred_region
      %40 = dma.done [#allocation3], 21504
    $region33: #{fcnn_forward.1} parent=1 // pred_fallthru
      _
    %v42 = vld [vmem:[%s0] sm:$0xff]
    %v43 = vld [vmem:[%s0 + $0x8] sm:$0xff]
    %v44 = vld [vmem:[%s0 + $0x10] sm:$0xff]
    %v45 = vld [vmem:[%s0 + $0x18] sm:$0xf]
    %v46 = vld [vmem:[#allocation2] sm:$0xff]
    %v47 = vld [vmem:[#allocation2 + $0x8] sm:$0xf]
    %v48 = vld [vmem:[#allocation2 + $0xc] sm:$0xff]
    %v49 = vld [vmem:[#allocation2 + $0x14] sm:$0xf]
    %v50 = vld [vmem:[#allocation2 + $0x18] sm:$0xff]
    %v51 = vld [vmem:[#allocation2 + $0x20] sm:$0xf]
    %v52 = vld [vmem:[#allocation2 + $0x24] sm:$0xff]
    %v53 = vld [vmem:[#allocation2 + $0x2c] sm:$0xf]
    %v54 = vld [vmem:[#allocation2 + $0x30] sm:$0xff]
    %v55 = vld [vmem:[#allocation2 + $0x38] sm:$0xf]
    %v56 = vld [vmem:[#allocation2 + $0x3c] sm:$0xff]
    %v57 = vld [vmem:[#allocation2 + $0x44] sm:$0xf]
    %v58 = vld [vmem:[#allocation2 + $0x48] sm:$0xff]
    %v59 = vld [vmem:[#allocation2 + $0x50] sm:$0xf]
    %v60 = vld [vmem:[#allocation2 + $0x54] sm:$0xff]
    %v61 = vld [vmem:[#allocation2 + $0x5c] sm:$0xf]
    %v62 = vld [vmem:[#allocation2 + $0x60] sm:$0xff]
    %v63 = vld [vmem:[#allocation2 + $0x68] sm:$0xf]
    %v64 = vld [vmem:[#allocation2 + $0x6c] sm:$0xff]
    %v65 = vld [vmem:[#allocation2 + $0x74] sm:$0xf]
    %v66 = vld [vmem:[#allocation2 + $0x78] sm:$0xff]
    %v67 = vld [vmem:[#allocation2 + $0x80] sm:$0xf]
    %v68 = vld [vmem:[#allocation2 + $0x84] sm:$0xff]
    %v69 = vld [vmem:[#allocation2 + $0x8c] sm:$0xf]
    %v70 = vld [vmem:[#allocation2 + $0x90] sm:$0xff]
    %v71 = vld [vmem:[#allocation2 + $0x98] sm:$0xf]
    %v72 = vld [vmem:[#allocation2 + $0x9c] sm:$0xff]
    %v73 = vld [vmem:[#allocation2 + $0xa4] sm:$0xf]
    %v74 = vld [vmem:[#allocation2 + $0xa8] sm:$0xff]
    %v75 = vld [vmem:[#allocation2 + $0xb0] sm:$0xf]
    %v76 = vld [vmem:[#allocation2 + $0xb4] sm:$0xff]
    %v77 = vld [vmem:[#allocation2 + $0xbc] sm:$0xf]
    %v78 = vld [vmem:[#allocation2 + $0xc0] sm:$0xff]
    %v79 = vld [vmem:[#allocation2 + $0xc8] sm:$0xf]
    %v80 = vld [vmem:[#allocation2 + $0xcc] sm:$0xff]
    %v81 = vld [vmem:[#allocation2 + $0xd4] sm:$0xf]
    %v82 = vld [vmem:[#allocation2 + $0xd8] sm:$0xff]
    %v83 = vld [vmem:[#allocation2 + $0xe0] sm:$0xf]
    %v84 = vld [vmem:[#allocation2 + $0xe4] sm:$0xff]
    %v85 = vld [vmem:[#allocation2 + $0xec] sm:$0xf]
    %v86 = vld [vmem:[#allocation2 + $0xf0] sm:$0xff]
    %v87 = vld [vmem:[#allocation2 + $0xf8] sm:$0xf]
    %v88 = vld [vmem:[#allocation2 + $0xfc] sm:$0xff]
    %v89 = vld [vmem:[#allocation2 + $0x104] sm:$0xf]
    %v90 = vld [vmem:[#allocation2 + $0x108] sm:$0xff]
    %v91 = vld [vmem:[#allocation2 + $0x110] sm:$0xf]
    %v92 = vld [vmem:[#allocation2 + $0x114] sm:$0xff]
    %v93 = vld [vmem:[#allocation2 + $0x11c] sm:$0xf]
    %v94 = vld [vmem:[#allocation2 + $0x120] sm:$0xff]
    %v95 = vld [vmem:[#allocation2 + $0x128] sm:$0xf]
    %v96 = vld [vmem:[#allocation2 + $0x12c] sm:$0xff]
    %v97 = vld [vmem:[#allocation2 + $0x134] sm:$0xf]
    %v98 = vld [vmem:[#allocation2 + $0x138] sm:$0xff]
    %v99 = vld [vmem:[#allocation2 + $0x140] sm:$0xf]
    %v100 = vld [vmem:[#allocation2 + $0x144] sm:$0xff]
    %v101 = vld [vmem:[#allocation2 + $0x14c] sm:$0xf]
    %v102 = vld [vmem:[#allocation2 + $0x150] sm:$0xff]
    %v103 = vld [vmem:[#allocation2 + $0x158] sm:$0xf]
    %v104 = vld [vmem:[#allocation2 + $0x15c] sm:$0xff]
    %v105 = vld [vmem:[#allocation2 + $0x164] sm:$0xf]
    %v106 = vld [vmem:[#allocation2 + $0x168] sm:$0xff]
    %v107 = vld [vmem:[#allocation2 + $0x170] sm:$0xf]
    %v108 = vld [vmem:[#allocation2 + $0x174] sm:$0xff]
    %v109 = vld [vmem:[#allocation2 + $0x17c] sm:$0xf]
    %v110 = vld [vmem:[#allocation2 + $0x180] sm:$0xff]
    %v111 = vld [vmem:[#allocation2 + $0x188] sm:$0xf]
    %v112 = vld [vmem:[#allocation2 + $0x18c] sm:$0xff]
    %v113 = vld [vmem:[#allocation2 + $0x194] sm:$0xf]
    %v114 = vld [vmem:[#allocation2 + $0x198] sm:$0xff]
    %v115 = vld [vmem:[#allocation2 + $0x1a0] sm:$0xf]
    %v116 = vld [vmem:[#allocation2 + $0x1a4] sm:$0xff]
    %v117 = vld [vmem:[#allocation2 + $0x1ac] sm:$0xf]
    %v118 = vld [vmem:[#allocation2 + $0x1b0] sm:$0xff]
    %v119 = vld [vmem:[#allocation2 + $0x1b8] sm:$0xf]
    %v120 = vld [vmem:[#allocation2 + $0x1bc] sm:$0xff]
    %v121 = vld [vmem:[#allocation2 + $0x1c4] sm:$0xf]
    %v122 = vld [vmem:[#allocation2 + $0x1c8] sm:$0xff]
    %v123 = vld [vmem:[#allocation2 + $0x1d0] sm:$0xf]
    %v124 = vld [vmem:[#allocation2 + $0x1d4] sm:$0xff]
    %v125 = vld [vmem:[#allocation2 + $0x1dc] sm:$0xf]
    %v126 = vld [vmem:[#allocation2 + $0x1e0] sm:$0xff]
    %v127 = vld [vmem:[#allocation2 + $0x1e8] sm:$0xf]
    %v128 = vld [vmem:[#allocation2 + $0x1ec] sm:$0xff]
    %v129 = vld [vmem:[#allocation2 + $0x1f4] sm:$0xf]
    %v130 = vld [vmem:[#allocation2 + $0x1f8] sm:$0xff]
    %v131 = vld [vmem:[#allocation2 + $0x200] sm:$0xf]
    %v132 = vld [vmem:[#allocation2 + $0x204] sm:$0xff]
    %v133 = vld [vmem:[#allocation2 + $0x20c] sm:$0xf]
    %v134 = vld [vmem:[#allocation2 + $0x210] sm:$0xff]
    %v135 = vld [vmem:[#allocation2 + $0x218] sm:$0xf]
    %v136 = vld [vmem:[#allocation2 + $0x21c] sm:$0xff]
    %v137 = vld [vmem:[#allocation2 + $0x224] sm:$0xf]
    %v138 = vld [vmem:[#allocation2 + $0x228] sm:$0xff]
    %v139 = vld [vmem:[#allocation2 + $0x230] sm:$0xf]
    %v140 = vld [vmem:[#allocation2 + $0x234] sm:$0xff]
    %v141 = vld [vmem:[#allocation2 + $0x23c] sm:$0xf]
    %v142 = vld [vmem:[#allocation2 + $0x240] sm:$0xff]
    %v143 = vld [vmem:[#allocation2 + $0x248] sm:$0xf]
    %v144 = vld [vmem:[#allocation2 + $0x24c] sm:$0xff]
    %v145 = vld [vmem:[#allocation2 + $0x254] sm:$0xf]
    %v146 = vld [vmem:[#allocation2 + $0x258] sm:$0xff]
    %v147 = vld [vmem:[#allocation2 + $0x260] sm:$0xf]
    %v148 = vld [vmem:[#allocation2 + $0x264] sm:$0xff]
    %v149 = vld [vmem:[#allocation2 + $0x26c] sm:$0xf]
    %v150 = vld [vmem:[#allocation2 + $0x270] sm:$0xff]
    %v151 = vld [vmem:[#allocation2 + $0x278] sm:$0xf]
    %v152 = vld [vmem:[#allocation2 + $0x27c] sm:$0xff]
    %v153 = vld [vmem:[#allocation2 + $0x284] sm:$0xf]
    %v154 = vld [vmem:[#allocation2 + $0x288] sm:$0xff]
    %v155 = vld [vmem:[#allocation2 + $0x290] sm:$0xf]
    %v156 = vld [vmem:[#allocation2 + $0x294] sm:$0xff]
    %v157 = vld [vmem:[#allocation2 + $0x29c] sm:$0xf]
    %v158 = vld [vmem:[#allocation2 + $0x2a0] sm:$0xff]
    %v159 = vld [vmem:[#allocation2 + $0x2a8] sm:$0xf]
    %v160 = vld [vmem:[#allocation2 + $0x2ac] sm:$0xff]
    %v161 = vld [vmem:[#allocation2 + $0x2b4] sm:$0xf]
    %v162 = vld [vmem:[#allocation2 + $0x2b8] sm:$0xff]
    %v163 = vld [vmem:[#allocation2 + $0x2c0] sm:$0xf]
    %v164 = vld [vmem:[#allocation2 + $0x2c4] sm:$0xff]
    %v165 = vld [vmem:[#allocation2 + $0x2cc] sm:$0xf]
    %v166 = vld [vmem:[#allocation2 + $0x2d0] sm:$0xff]
    %v167 = vld [vmem:[#allocation2 + $0x2d8] sm:$0xf]
    %v168 = vld [vmem:[#allocation2 + $0x2dc] sm:$0xff]
    %v169 = vld [vmem:[#allocation2 + $0x2e4] sm:$0xf]
    %v170 = vld [vmem:[#allocation2 + $0x2e8] sm:$0xff]
    %v171 = vld [vmem:[#allocation2 + $0x2f0] sm:$0xf]
    %v172 = vld [vmem:[#allocation2 + $0x2f4] sm:$0xff]
    %v173 = vld [vmem:[#allocation2 + $0x2fc] sm:$0xf]
    %v174 = vld [vmem:[#allocation2 + $0x300] sm:$0xff]
    %v175 = vld [vmem:[#allocation2 + $0x308] sm:$0xf]
    %v176 = vld [vmem:[#allocation2 + $0x30c] sm:$0xff]
    %v177 = vld [vmem:[#allocation2 + $0x314] sm:$0xf]
    %v178 = vld [vmem:[#allocation2 + $0x318] sm:$0xff]
    %v179 = vld [vmem:[#allocation2 + $0x320] sm:$0xf]
    %v180 = vld [vmem:[#allocation2 + $0x324] sm:$0xff]
    %v181 = vld [vmem:[#allocation2 + $0x32c] sm:$0xf]
    %v182 = vld [vmem:[#allocation2 + $0x330] sm:$0xff]
    %v183 = vld [vmem:[#allocation2 + $0x338] sm:$0xf]
    %v184 = vld [vmem:[#allocation2 + $0x33c] sm:$0xff]
    %v185 = vld [vmem:[#allocation2 + $0x344] sm:$0xf]
    %v186 = vld [vmem:[#allocation2 + $0x348] sm:$0xff]
    %v187 = vld [vmem:[#allocation2 + $0x350] sm:$0xf]
    %v188 = vld [vmem:[#allocation2 + $0x354] sm:$0xff]
    %v189 = vld [vmem:[#allocation2 + $0x35c] sm:$0xf]
    %v190 = vld [vmem:[#allocation2 + $0x360] sm:$0xff]
    %v191 = vld [vmem:[#allocation2 + $0x368] sm:$0xf]
    %v192 = vld [vmem:[#allocation2 + $0x36c] sm:$0xff]
    %v193 = vld [vmem:[#allocation2 + $0x374] sm:$0xf]
    %v194 = vld [vmem:[#allocation2 + $0x378] sm:$0xff]
    %v195 = vld [vmem:[#allocation2 + $0x380] sm:$0xf]
    %v196 = vld [vmem:[#allocation2 + $0x384] sm:$0xff]
    %v197 = vld [vmem:[#allocation2 + $0x38c] sm:$0xf]
    %v198 = vld [vmem:[#allocation2 + $0x390] sm:$0xff]
    %v199 = vld [vmem:[#allocation2 + $0x398] sm:$0xf]
    %v200 = vld [vmem:[#allocation2 + $0x39c] sm:$0xff]
    %v201 = vld [vmem:[#allocation2 + $0x3a4] sm:$0xf]
    %v202 = vld [vmem:[#allocation2 + $0x3a8] sm:$0xff]
    %v203 = vld [vmem:[#allocation2 + $0x3b0] sm:$0xf]
    %v204 = vld [vmem:[#allocation2 + $0x3b4] sm:$0xff]
    %v205 = vld [vmem:[#allocation2 + $0x3bc] sm:$0xf]
    %v206 = vld [vmem:[#allocation2 + $0x3c0] sm:$0xff]
    %v207 = vld [vmem:[#allocation2 + $0x3c8] sm:$0xf]
    %v208 = vld [vmem:[#allocation2 + $0x3cc] sm:$0xff]
    %v209 = vld [vmem:[#allocation2 + $0x3d4] sm:$0xf]
    %v210 = vld [vmem:[#allocation2 + $0x3d8] sm:$0xff]
    %v211 = vld [vmem:[#allocation2 + $0x3e0] sm:$0xf]
    %v212 = vld [vmem:[#allocation2 + $0x3e4] sm:$0xff]
    %v213 = vld [vmem:[#allocation2 + $0x3ec] sm:$0xf]
    %v214 = vld [vmem:[#allocation2 + $0x3f0] sm:$0xff]
    %v215 = vld [vmem:[#allocation2 + $0x3f8] sm:$0xf]
    %v216 = vld [vmem:[#allocation2 + $0x3fc] sm:$0xff]
    %v217 = vld [vmem:[#allocation2 + $0x404] sm:$0xf]
    %v218 = vld [vmem:[#allocation2 + $0x408] sm:$0xff]
    %v219 = vld [vmem:[#allocation2 + $0x410] sm:$0xf]
    %v220 = vld [vmem:[#allocation2 + $0x414] sm:$0xff]
    %v221 = vld [vmem:[#allocation2 + $0x41c] sm:$0xf]
    %v222 = vld [vmem:[#allocation2 + $0x420] sm:$0xff]
    %v223 = vld [vmem:[#allocation2 + $0x428] sm:$0xf]
    %v224 = vld [vmem:[#allocation2 + $0x42c] sm:$0xff]
    %v225 = vld [vmem:[#allocation2 + $0x434] sm:$0xf]
    %v226 = vld [vmem:[#allocation2 + $0x438] sm:$0xff]
    %v227 = vld [vmem:[#allocation2 + $0x440] sm:$0xf]
    %v228 = vld [vmem:[#allocation2 + $0x444] sm:$0xff]
    %v229 = vld [vmem:[#allocation2 + $0x44c] sm:$0xf]
    %v230 = vld [vmem:[#allocation2 + $0x450] sm:$0xff]
    %v231 = vld [vmem:[#allocation2 + $0x458] sm:$0xf]
    %v232 = vld [vmem:[#allocation2 + $0x45c] sm:$0xff]
    %v233 = vld [vmem:[#allocation2 + $0x464] sm:$0xf]
    %v234 = vld [vmem:[#allocation2 + $0x468] sm:$0xff]
    %v235 = vld [vmem:[#allocation2 + $0x470] sm:$0xf]
    %v236 = vld [vmem:[#allocation2 + $0x474] sm:$0xff]
    %v237 = vld [vmem:[#allocation2 + $0x47c] sm:$0xf]
    %v238 = vld [vmem:[#allocation2 + $0x480] sm:$0xff]
    %v239 = vld [vmem:[#allocation2 + $0x488] sm:$0xf]
    %v240 = vld [vmem:[#allocation2 + $0x48c] sm:$0xff]
    %v241 = vld [vmem:[#allocation2 + $0x494] sm:$0xf]
    %v242 = vld [vmem:[#allocation2 + $0x498] sm:$0xff]
    %v243 = vld [vmem:[#allocation2 + $0x4a0] sm:$0xf]
    %v244 = vld [vmem:[#allocation2 + $0x4a4] sm:$0xff]
    %v245 = vld [vmem:[#allocation2 + $0x4ac] sm:$0xf]
    %v246 = vld [vmem:[#allocation2 + $0x4b0] sm:$0xff]
    %v247 = vld [vmem:[#allocation2 + $0x4b8] sm:$0xf]
    %v248 = vld [vmem:[#allocation2 + $0x4bc] sm:$0xff]
    %v249 = vld [vmem:[#allocation2 + $0x4c4] sm:$0xf]
    %v250 = vld [vmem:[#allocation2 + $0x4c8] sm:$0xff]
    %v251 = vld [vmem:[#allocation2 + $0x4d0] sm:$0xf]
    %v252 = vld [vmem:[#allocation2 + $0x4d4] sm:$0xff]
    %v253 = vld [vmem:[#allocation2 + $0x4dc] sm:$0xf]
    %v254 = vld [vmem:[#allocation2 + $0x4e0] sm:$0xff]
    %v255 = vld [vmem:[#allocation2 + $0x4e8] sm:$0xf]
    %v256 = vld [vmem:[#allocation2 + $0x4ec] sm:$0xff]
    %v257 = vld [vmem:[#allocation2 + $0x4f4] sm:$0xf]
    %v258 = vld [vmem:[#allocation2 + $0x4f8] sm:$0xff]
    %v259 = vld [vmem:[#allocation2 + $0x500] sm:$0xf]
    %v260 = vld [vmem:[#allocation2 + $0x504] sm:$0xff]
    %v261 = vld [vmem:[#allocation2 + $0x50c] sm:$0xf]
    %v262 = vld [vmem:[#allocation2 + $0x510] sm:$0xff]
    %v263 = vld [vmem:[#allocation2 + $0x518] sm:$0xf]
    %v264 = vld [vmem:[#allocation2 + $0x51c] sm:$0xff]
    %v265 = vld [vmem:[#allocation2 + $0x524] sm:$0xf]
    %v266 = vld [vmem:[#allocation2 + $0x528] sm:$0xff]
    %v267 = vld [vmem:[#allocation2 + $0x530] sm:$0xf]
    %v268 = vld [vmem:[#allocation2 + $0x534] sm:$0xff]
    %v269 = vld [vmem:[#allocation2 + $0x53c] sm:$0xf]
    %v270 = vld [vmem:[%s2] sm:$0x7]
    %v272 = vlaneseq
    %v273 = vshrl.u32 %v272, 7
    %v274 = vsub.s32 0, %v273
    %v275 = vrot.slane %v270, %v274
    %v276 = vlaneseq
    %v277 = vshrl.u32 %v276, 7
    %v278 = vsub.s32 1, %v277
    %v279 = vrot.slane %v270, %v278
    %v280 = vlaneseq
    %v281 = vshrl.u32 %v280, 7
    %v282 = vsub.s32 2, %v281
    %v283 = vrot.slane %v270, %v282
    %v291 = vunpack.c.l.b16 %v42
    %v292 = vunpack.c.h.b16 %v42
    %v293 = vunpack.c.l.b16 %v43
    %v294 = vunpack.c.h.b16 %v43
    %v295 = vunpack.c.l.b16 %v44
    %v296 = vunpack.c.h.b16 %v44
    %v297 = vunpack.c.l.b16 %v45
    %v298 = vpack.c.b16 %v291, %v291
    %v299 = vpack.c.b16 %v292, %v292
    %v300 = vpack.c.b16 %v293, %v293
    %v301 = vpack.c.b16 %v294, %v294
    %v302 = vpack.c.b16 %v295, %v295
    %v303 = vpack.c.b16 %v296, %v296
    %v304 = vpack.c.b16 %v297, %v297
    %v536 = vunpack.c.l.b16 %v46
    %v537 = vunpack.c.h.b16 %v46
    %v538 = vunpack.c.l.b16 %v47
    %v539 = vunpack.c.l.b16 %v48
    %v540 = vunpack.c.h.b16 %v48
    %v541 = vunpack.c.l.b16 %v49
    %v542 = vunpack.c.l.b16 %v50
    %v543 = vunpack.c.h.b16 %v50
    %v544 = vunpack.c.l.b16 %v51
    %v545 = vunpack.c.l.b16 %v52
    %v546 = vunpack.c.h.b16 %v52
    %v547 = vunpack.c.l.b16 %v53
    %v548 = vunpack.c.l.b16 %v54
    %v549 = vunpack.c.h.b16 %v54
    %v550 = vunpack.c.l.b16 %v55
    %v551 = vunpack.c.l.b16 %v56
    %v552 = vunpack.c.h.b16 %v56
    %v553 = vunpack.c.l.b16 %v57
    %v554 = vunpack.c.l.b16 %v58
    %v555 = vunpack.c.h.b16 %v58
    %v556 = vunpack.c.l.b16 %v59
    %v557 = vunpack.c.l.b16 %v60
    %v558 = vunpack.c.h.b16 %v60
    %v559 = vunpack.c.l.b16 %v61
    %v560 = vunpack.c.l.b16 %v62
    %v561 = vunpack.c.h.b16 %v62
    %v562 = vunpack.c.l.b16 %v63
    %v563 = vunpack.c.l.b16 %v64
    %v564 = vunpack.c.h.b16 %v64
    %v565 = vunpack.c.l.b16 %v65
    %v566 = vunpack.c.l.b16 %v66
    %v567 = vunpack.c.h.b16 %v66
    %v568 = vunpack.c.l.b16 %v67
    %v569 = vunpack.c.l.b16 %v68
    %v570 = vunpack.c.h.b16 %v68
    %v571 = vunpack.c.l.b16 %v69
    %v572 = vunpack.c.l.b16 %v70
    %v573 = vunpack.c.h.b16 %v70
    %v574 = vunpack.c.l.b16 %v71
    %v575 = vunpack.c.l.b16 %v72
    %v576 = vunpack.c.h.b16 %v72
    %v577 = vunpack.c.l.b16 %v73
    %v578 = vunpack.c.l.b16 %v74
    %v579 = vunpack.c.h.b16 %v74
    %v580 = vunpack.c.l.b16 %v75
    %v581 = vunpack.c.l.b16 %v76
    %v582 = vunpack.c.h.b16 %v76
    %v583 = vunpack.c.l.b16 %v77
    %v584 = vunpack.c.l.b16 %v78
    %v585 = vunpack.c.h.b16 %v78
    %v586 = vunpack.c.l.b16 %v79
    %v587 = vunpack.c.l.b16 %v80
    %v588 = vunpack.c.h.b16 %v80
    %v589 = vunpack.c.l.b16 %v81
    %v590 = vunpack.c.l.b16 %v82
    %v591 = vunpack.c.h.b16 %v82
    %v592 = vunpack.c.l.b16 %v83
    %v593 = vunpack.c.l.b16 %v84
    %v594 = vunpack.c.h.b16 %v84
    %v595 = vunpack.c.l.b16 %v85
    %v596 = vunpack.c.l.b16 %v86
    %v597 = vunpack.c.h.b16 %v86
    %v598 = vunpack.c.l.b16 %v87
    %v599 = vunpack.c.l.b16 %v88
    %v600 = vunpack.c.h.b16 %v88
    %v601 = vunpack.c.l.b16 %v89
    %v602 = vunpack.c.l.b16 %v90
    %v603 = vunpack.c.h.b16 %v90
    %v604 = vunpack.c.l.b16 %v91
    %v605 = vunpack.c.l.b16 %v92
    %v606 = vunpack.c.h.b16 %v92
    %v607 = vunpack.c.l.b16 %v93
    %v608 = vunpack.c.l.b16 %v94
    %v609 = vunpack.c.h.b16 %v94
    %v610 = vunpack.c.l.b16 %v95
    %v611 = vunpack.c.l.b16 %v96
    %v612 = vunpack.c.h.b16 %v96
    %v613 = vunpack.c.l.b16 %v97
    %v614 = vunpack.c.l.b16 %v98
    %v615 = vunpack.c.h.b16 %v98
    %v616 = vunpack.c.l.b16 %v99
    %v617 = vunpack.c.l.b16 %v100
    %v618 = vunpack.c.h.b16 %v100
    %v619 = vunpack.c.l.b16 %v101
    %v620 = vunpack.c.l.b16 %v102
    %v621 = vunpack.c.h.b16 %v102
    %v622 = vunpack.c.l.b16 %v103
    %v623 = vunpack.c.l.b16 %v104
    %v624 = vunpack.c.h.b16 %v104
    %v625 = vunpack.c.l.b16 %v105
    %v626 = vunpack.c.l.b16 %v106
    %v627 = vunpack.c.h.b16 %v106
    %v628 = vunpack.c.l.b16 %v107
    %v629 = vunpack.c.l.b16 %v108
    %v630 = vunpack.c.h.b16 %v108
    %v631 = vunpack.c.l.b16 %v109
    %v632 = vunpack.c.l.b16 %v110
    %v633 = vunpack.c.h.b16 %v110
    %v634 = vunpack.c.l.b16 %v111
    %v635 = vunpack.c.l.b16 %v112
    %v636 = vunpack.c.h.b16 %v112
    %v637 = vunpack.c.l.b16 %v113
    %v638 = vunpack.c.l.b16 %v114
    %v639 = vunpack.c.h.b16 %v114
    %v640 = vunpack.c.l.b16 %v115
    %v641 = vunpack.c.l.b16 %v116
    %v642 = vunpack.c.h.b16 %v116
    %v643 = vunpack.c.l.b16 %v117
    %v644 = vunpack.c.l.b16 %v118
    %v645 = vunpack.c.h.b16 %v118
    %v646 = vunpack.c.l.b16 %v119
    %v647 = vunpack.c.l.b16 %v120
    %v648 = vunpack.c.h.b16 %v120
    %v649 = vunpack.c.l.b16 %v121
    %v650 = vunpack.c.l.b16 %v122
    %v651 = vunpack.c.h.b16 %v122
    %v652 = vunpack.c.l.b16 %v123
    %v653 = vunpack.c.l.b16 %v124
    %v654 = vunpack.c.h.b16 %v124
    %v655 = vunpack.c.l.b16 %v125
    %v656 = vunpack.c.l.b16 %v126
    %v657 = vunpack.c.h.b16 %v126
    %v658 = vunpack.c.l.b16 %v127
    %v659 = vunpack.c.l.b16 %v128
    %v660 = vunpack.c.h.b16 %v128
    %v661 = vunpack.c.l.b16 %v129
    %v662 = vunpack.c.l.b16 %v130
    %v663 = vunpack.c.h.b16 %v130
    %v664 = vunpack.c.l.b16 %v131
    %v665 = vunpack.c.l.b16 %v132
    %v666 = vunpack.c.h.b16 %v132
    %v667 = vunpack.c.l.b16 %v133
    %v668 = vunpack.c.l.b16 %v134
    %v669 = vunpack.c.h.b16 %v134
    %v670 = vunpack.c.l.b16 %v135
    %v671 = vunpack.c.l.b16 %v136
    %v672 = vunpack.c.h.b16 %v136
    %v673 = vunpack.c.l.b16 %v137
    %v674 = vunpack.c.l.b16 %v138
    %v675 = vunpack.c.h.b16 %v138
    %v676 = vunpack.c.l.b16 %v139
    %v677 = vunpack.c.l.b16 %v140
    %v678 = vunpack.c.h.b16 %v140
    %v679 = vunpack.c.l.b16 %v141
    %v680 = vunpack.c.l.b16 %v142
    %v681 = vunpack.c.h.b16 %v142
    %v682 = vunpack.c.l.b16 %v143
    %v683 = vunpack.c.l.b16 %v144
    %v684 = vunpack.c.h.b16 %v144
    %v685 = vunpack.c.l.b16 %v145
    %v686 = vunpack.c.l.b16 %v146
    %v687 = vunpack.c.h.b16 %v146
    %v688 = vunpack.c.l.b16 %v147
    %v689 = vunpack.c.l.b16 %v148
    %v690 = vunpack.c.h.b16 %v148
    %v691 = vunpack.c.l.b16 %v149
    %v692 = vunpack.c.l.b16 %v150
    %v693 = vunpack.c.h.b16 %v150
    %v694 = vunpack.c.l.b16 %v151
    %v695 = vunpack.c.l.b16 %v152
    %v696 = vunpack.c.h.b16 %v152
    %v697 = vunpack.c.l.b16 %v153
    %v698 = vunpack.c.l.b16 %v154
    %v699 = vunpack.c.h.b16 %v154
    %v700 = vunpack.c.l.b16 %v155
    %v701 = vunpack.c.l.b16 %v156
    %v702 = vunpack.c.h.b16 %v156
    %v703 = vunpack.c.l.b16 %v157
    %v704 = vunpack.c.l.b16 %v158
    %v705 = vunpack.c.h.b16 %v158
    %v706 = vunpack.c.l.b16 %v159
    %v707 = vunpack.c.l.b16 %v160
    %v708 = vunpack.c.h.b16 %v160
    %v709 = vunpack.c.l.b16 %v161
    %v710 = vunpack.c.l.b16 %v162
    %v711 = vunpack.c.h.b16 %v162
    %v712 = vunpack.c.l.b16 %v163
    %v713 = vunpack.c.l.b16 %v164
    %v714 = vunpack.c.h.b16 %v164
    %v715 = vunpack.c.l.b16 %v165
    %v716 = vunpack.c.l.b16 %v166
    %v717 = vunpack.c.h.b16 %v166
    %v718 = vunpack.c.l.b16 %v167
    %v719 = vunpack.c.l.b16 %v168
    %v720 = vunpack.c.h.b16 %v168
    %v721 = vunpack.c.l.b16 %v169
    %v722 = vunpack.c.l.b16 %v170
    %v723 = vunpack.c.h.b16 %v170
    %v724 = vunpack.c.l.b16 %v171
    %v725 = vunpack.c.l.b16 %v172
    %v726 = vunpack.c.h.b16 %v172
    %v727 = vunpack.c.l.b16 %v173
    %v728 = vunpack.c.l.b16 %v174
    %v729 = vunpack.c.h.b16 %v174
    %v730 = vunpack.c.l.b16 %v175
    %v731 = vunpack.c.l.b16 %v176
    %v732 = vunpack.c.h.b16 %v176
    %v733 = vunpack.c.l.b16 %v177
    %v734 = vunpack.c.l.b16 %v178
    %v735 = vunpack.c.h.b16 %v178
    %v736 = vunpack.c.l.b16 %v179
    %v737 = vunpack.c.l.b16 %v180
    %v738 = vunpack.c.h.b16 %v180
    %v739 = vunpack.c.l.b16 %v181
    %v740 = vunpack.c.l.b16 %v182
    %v741 = vunpack.c.h.b16 %v182
    %v742 = vunpack.c.l.b16 %v183
    %v743 = vunpack.c.l.b16 %v184
    %v744 = vunpack.c.h.b16 %v184
    %v745 = vunpack.c.l.b16 %v185
    %v746 = vunpack.c.l.b16 %v186
    %v747 = vunpack.c.h.b16 %v186
    %v748 = vunpack.c.l.b16 %v187
    %v749 = vunpack.c.l.b16 %v188
    %v750 = vunpack.c.h.b16 %v188
    %v751 = vunpack.c.l.b16 %v189
    %v752 = vunpack.c.l.b16 %v190
    %v753 = vunpack.c.h.b16 %v190
    %v754 = vunpack.c.l.b16 %v191
    %v755 = vunpack.c.l.b16 %v192
    %v756 = vunpack.c.h.b16 %v192
    %v757 = vunpack.c.l.b16 %v193
    %v758 = vunpack.c.l.b16 %v194
    %v759 = vunpack.c.h.b16 %v194
    %v760 = vunpack.c.l.b16 %v195
    %v761 = vunpack.c.l.b16 %v196
    %v762 = vunpack.c.h.b16 %v196
    %v763 = vunpack.c.l.b16 %v197
    %v764 = vunpack.c.l.b16 %v198
    %v765 = vunpack.c.h.b16 %v198
    %v766 = vunpack.c.l.b16 %v199
    %v767 = vunpack.c.l.b16 %v200
    %v768 = vunpack.c.h.b16 %v200
    %v769 = vunpack.c.l.b16 %v201
    %v770 = vunpack.c.l.b16 %v202
    %v771 = vunpack.c.h.b16 %v202
    %v772 = vunpack.c.l.b16 %v203
    %v773 = vunpack.c.l.b16 %v204
    %v774 = vunpack.c.h.b16 %v204
    %v775 = vunpack.c.l.b16 %v205
    %v776 = vunpack.c.l.b16 %v206
    %v777 = vunpack.c.h.b16 %v206
    %v778 = vunpack.c.l.b16 %v207
    %v779 = vunpack.c.l.b16 %v208
    %v780 = vunpack.c.h.b16 %v208
    %v781 = vunpack.c.l.b16 %v209
    %v782 = vunpack.c.l.b16 %v210
    %v783 = vunpack.c.h.b16 %v210
    %v784 = vunpack.c.l.b16 %v211
    %v785 = vunpack.c.l.b16 %v212
    %v786 = vunpack.c.h.b16 %v212
    %v787 = vunpack.c.l.b16 %v213
    %v788 = vunpack.c.l.b16 %v214
    %v789 = vunpack.c.h.b16 %v214
    %v790 = vunpack.c.l.b16 %v215
    %v791 = vunpack.c.l.b16 %v216
    %v792 = vunpack.c.h.b16 %v216
    %v793 = vunpack.c.l.b16 %v217
    %v794 = vunpack.c.l.b16 %v218
    %v795 = vunpack.c.h.b16 %v218
    %v796 = vunpack.c.l.b16 %v219
    %v797 = vunpack.c.l.b16 %v220
    %v798 = vunpack.c.h.b16 %v220
    %v799 = vunpack.c.l.b16 %v221
    %v800 = vunpack.c.l.b16 %v222
    %v801 = vunpack.c.h.b16 %v222
    %v802 = vunpack.c.l.b16 %v223
    %v803 = vunpack.c.l.b16 %v224
    %v804 = vunpack.c.h.b16 %v224
    %v805 = vunpack.c.l.b16 %v225
    %v806 = vunpack.c.l.b16 %v226
    %v807 = vunpack.c.h.b16 %v226
    %v808 = vunpack.c.l.b16 %v227
    %v809 = vunpack.c.l.b16 %v228
    %v810 = vunpack.c.h.b16 %v228
    %v811 = vunpack.c.l.b16 %v229
    %v812 = vunpack.c.l.b16 %v230
    %v813 = vunpack.c.h.b16 %v230
    %v814 = vunpack.c.l.b16 %v231
    %v815 = vunpack.c.l.b16 %v232
    %v816 = vunpack.c.h.b16 %v232
    %v817 = vunpack.c.l.b16 %v233
    %v818 = vunpack.c.l.b16 %v234
    %v819 = vunpack.c.h.b16 %v234
    %v820 = vunpack.c.l.b16 %v235
    %v821 = vunpack.c.l.b16 %v236
    %v822 = vunpack.c.h.b16 %v236
    %v823 = vunpack.c.l.b16 %v237
    %v824 = vunpack.c.l.b16 %v238
    %v825 = vunpack.c.h.b16 %v238
    %v826 = vunpack.c.l.b16 %v239
    %v827 = vunpack.c.l.b16 %v240
    %v828 = vunpack.c.h.b16 %v240
    %v829 = vunpack.c.l.b16 %v241
    %v830 = vunpack.c.l.b16 %v242
    %v831 = vunpack.c.h.b16 %v242
    %v832 = vunpack.c.l.b16 %v243
    %v833 = vunpack.c.l.b16 %v244
    %v834 = vunpack.c.h.b16 %v244
    %v835 = vunpack.c.l.b16 %v245
    %v836 = vunpack.c.l.b16 %v246
    %v837 = vunpack.c.h.b16 %v246
    %v838 = vunpack.c.l.b16 %v247
    %v839 = vunpack.c.l.b16 %v248
    %v840 = vunpack.c.h.b16 %v248
    %v841 = vunpack.c.l.b16 %v249
    %v842 = vunpack.c.l.b16 %v250
    %v843 = vunpack.c.h.b16 %v250
    %v844 = vunpack.c.l.b16 %v251
    %v845 = vunpack.c.l.b16 %v252
    %v846 = vunpack.c.h.b16 %v252
    %v847 = vunpack.c.l.b16 %v253
    %v848 = vunpack.c.l.b16 %v254
    %v849 = vunpack.c.h.b16 %v254
    %v850 = vunpack.c.l.b16 %v255
    %v851 = vunpack.c.l.b16 %v256
    %v852 = vunpack.c.h.b16 %v256
    %v853 = vunpack.c.l.b16 %v257
    %v854 = vunpack.c.l.b16 %v258
    %v855 = vunpack.c.h.b16 %v258
    %v856 = vunpack.c.l.b16 %v259
    %v857 = vunpack.c.l.b16 %v260
    %v858 = vunpack.c.h.b16 %v260
    %v859 = vunpack.c.l.b16 %v261
    %v860 = vunpack.c.l.b16 %v262
    %v861 = vunpack.c.h.b16 %v262
    %v862 = vunpack.c.l.b16 %v263
    %v863 = vunpack.c.l.b16 %v264
    %v864 = vunpack.c.h.b16 %v264
    %v865 = vunpack.c.l.b16 %v265
    %v866 = vunpack.c.l.b16 %v266
    %v867 = vunpack.c.h.b16 %v266
    %v868 = vunpack.c.l.b16 %v267
    %v869 = vunpack.c.l.b16 %v268
    %v870 = vunpack.c.h.b16 %v268
    %v871 = vunpack.c.l.b16 %v269
    %v872 = vpack.c.b16 %v539, %v536
    %v873 = vpack.c.b16 %v540, %v537
    %v874 = vpack.c.b16 %v541, %v538
    %v875 = vpack.c.b16 %v545, %v542
    %v876 = vpack.c.b16 %v546, %v543
    %v877 = vpack.c.b16 %v547, %v544
    %v878 = vpack.c.b16 %v551, %v548
    %v879 = vpack.c.b16 %v552, %v549
    %v880 = vpack.c.b16 %v553, %v550
    %v881 = vpack.c.b16 %v557, %v554
    %v882 = vpack.c.b16 %v558, %v555
    %v883 = vpack.c.b16 %v559, %v556
    %v884 = vpack.c.b16 %v563, %v560
    %v885 = vpack.c.b16 %v564, %v561
    %v886 = vpack.c.b16 %v565, %v562
    %v887 = vpack.c.b16 %v569, %v566
    %v888 = vpack.c.b16 %v570, %v567
    %v889 = vpack.c.b16 %v571, %v568
    %v890 = vpack.c.b16 %v575, %v572
    %v891 = vpack.c.b16 %v576, %v573
    %v892 = vpack.c.b16 %v577, %v574
    %v893 = vpack.c.b16 %v581, %v578
    %v894 = vpack.c.b16 %v582, %v579
    %v895 = vpack.c.b16 %v583, %v580
    %v896 = vpack.c.b16 %v587, %v584
    %v897 = vpack.c.b16 %v588, %v585
    %v898 = vpack.c.b16 %v589, %v586
    %v899 = vpack.c.b16 %v593, %v590
    %v900 = vpack.c.b16 %v594, %v591
    %v901 = vpack.c.b16 %v595, %v592
    %v902 = vpack.c.b16 %v599, %v596
    %v903 = vpack.c.b16 %v600, %v597
    %v904 = vpack.c.b16 %v601, %v598
    %v905 = vpack.c.b16 %v605, %v602
    %v906 = vpack.c.b16 %v606, %v603
    %v907 = vpack.c.b16 %v607, %v604
    %v908 = vpack.c.b16 %v611, %v608
    %v909 = vpack.c.b16 %v612, %v609
    %v910 = vpack.c.b16 %v613, %v610
    %v911 = vpack.c.b16 %v617, %v614
    %v912 = vpack.c.b16 %v618, %v615
    %v913 = vpack.c.b16 %v619, %v616
    %v914 = vpack.c.b16 %v623, %v620
    %v915 = vpack.c.b16 %v624, %v621
    %v916 = vpack.c.b16 %v625, %v622
    %v917 = vpack.c.b16 %v629, %v626
    %v918 = vpack.c.b16 %v630, %v627
    %v919 = vpack.c.b16 %v631, %v628
    %v920 = vpack.c.b16 %v635, %v632
    %v921 = vpack.c.b16 %v636, %v633
    %v922 = vpack.c.b16 %v637, %v634
    %v923 = vpack.c.b16 %v641, %v638
    %v924 = vpack.c.b16 %v642, %v639
    %v925 = vpack.c.b16 %v643, %v640
    %v926 = vpack.c.b16 %v647, %v644
    %v927 = vpack.c.b16 %v648, %v645
    %v928 = vpack.c.b16 %v649, %v646
    %v929 = vpack.c.b16 %v653, %v650
    %v930 = vpack.c.b16 %v654, %v651
    %v931 = vpack.c.b16 %v655, %v652
    %v932 = vpack.c.b16 %v659, %v656
    %v933 = vpack.c.b16 %v660, %v657
    %v934 = vpack.c.b16 %v661, %v658
    %v935 = vpack.c.b16 %v665, %v662
    %v936 = vpack.c.b16 %v666, %v663
    %v937 = vpack.c.b16 %v667, %v664
    %v938 = vpack.c.b16 %v671, %v668
    %v939 = vpack.c.b16 %v672, %v669
    %v940 = vpack.c.b16 %v673, %v670
    %v941 = vpack.c.b16 %v677, %v674
    %v942 = vpack.c.b16 %v678, %v675
    %v943 = vpack.c.b16 %v679, %v676
    %v944 = vpack.c.b16 %v683, %v680
    %v945 = vpack.c.b16 %v684, %v681
    %v946 = vpack.c.b16 %v685, %v682
    %v947 = vpack.c.b16 %v689, %v686
    %v948 = vpack.c.b16 %v690, %v687
    %v949 = vpack.c.b16 %v691, %v688
    %v950 = vpack.c.b16 %v695, %v692
    %v951 = vpack.c.b16 %v696, %v693
    %v952 = vpack.c.b16 %v697, %v694
    %v953 = vpack.c.b16 %v701, %v698
    %v954 = vpack.c.b16 %v702, %v699
    %v955 = vpack.c.b16 %v703, %v700
    %v956 = vpack.c.b16 %v707, %v704
    %v957 = vpack.c.b16 %v708, %v705
    %v958 = vpack.c.b16 %v709, %v706
    %v959 = vpack.c.b16 %v713, %v710
    %v960 = vpack.c.b16 %v714, %v711
    %v961 = vpack.c.b16 %v715, %v712
    %v962 = vpack.c.b16 %v719, %v716
    %v963 = vpack.c.b16 %v720, %v717
    %v964 = vpack.c.b16 %v721, %v718
    %v965 = vpack.c.b16 %v725, %v722
    %v966 = vpack.c.b16 %v726, %v723
    %v967 = vpack.c.b16 %v727, %v724
    %v968 = vpack.c.b16 %v731, %v728
    %v969 = vpack.c.b16 %v732, %v729
    %v970 = vpack.c.b16 %v733, %v730
    %v971 = vpack.c.b16 %v737, %v734
    %v972 = vpack.c.b16 %v738, %v735
    %v973 = vpack.c.b16 %v739, %v736
    %v974 = vpack.c.b16 %v743, %v740
    %v975 = vpack.c.b16 %v744, %v741
    %v976 = vpack.c.b16 %v745, %v742
    %v977 = vpack.c.b16 %v749, %v746
    %v978 = vpack.c.b16 %v750, %v747
    %v979 = vpack.c.b16 %v751, %v748
    %v980 = vpack.c.b16 %v755, %v752
    %v981 = vpack.c.b16 %v756, %v753
    %v982 = vpack.c.b16 %v757, %v754
    %v983 = vpack.c.b16 %v761, %v758
    %v984 = vpack.c.b16 %v762, %v759
    %v985 = vpack.c.b16 %v763, %v760
    %v986 = vpack.c.b16 %v767, %v764
    %v987 = vpack.c.b16 %v768, %v765
    %v988 = vpack.c.b16 %v769, %v766
    %v989 = vpack.c.b16 %v773, %v770
    %v990 = vpack.c.b16 %v774, %v771
    %v991 = vpack.c.b16 %v775, %v772
    %v992 = vpack.c.b16 %v779, %v776
    %v993 = vpack.c.b16 %v780, %v777
    %v994 = vpack.c.b16 %v781, %v778
    %v995 = vpack.c.b16 %v785, %v782
    %v996 = vpack.c.b16 %v786, %v783
    %v997 = vpack.c.b16 %v787, %v784
    %v998 = vpack.c.b16 %v791, %v788
    %v999 = vpack.c.b16 %v792, %v789
    %v1000 = vpack.c.b16 %v793, %v790
    %v1001 = vpack.c.b16 %v797, %v794
    %v1002 = vpack.c.b16 %v798, %v795
    %v1003 = vpack.c.b16 %v799, %v796
    %v1004 = vpack.c.b16 %v803, %v800
    %v1005 = vpack.c.b16 %v804, %v801
    %v1006 = vpack.c.b16 %v805, %v802
    %v1007 = vpack.c.b16 %v809, %v806
    %v1008 = vpack.c.b16 %v810, %v807
    %v1009 = vpack.c.b16 %v811, %v808
    %v1010 = vpack.c.b16 %v815, %v812
    %v1011 = vpack.c.b16 %v816, %v813
    %v1012 = vpack.c.b16 %v817, %v814
    %v1013 = vpack.c.b16 %v821, %v818
    %v1014 = vpack.c.b16 %v822, %v819
    %v1015 = vpack.c.b16 %v823, %v820
    %v1016 = vpack.c.b16 %v827, %v824
    %v1017 = vpack.c.b16 %v828, %v825
    %v1018 = vpack.c.b16 %v829, %v826
    %v1019 = vpack.c.b16 %v833, %v830
    %v1020 = vpack.c.b16 %v834, %v831
    %v1021 = vpack.c.b16 %v835, %v832
    %v1022 = vpack.c.b16 %v839, %v836
    %v1023 = vpack.c.b16 %v840, %v837
    %v1024 = vpack.c.b16 %v841, %v838
    %v1025 = vpack.c.b16 %v845, %v842
    %v1026 = vpack.c.b16 %v846, %v843
    %v1027 = vpack.c.b16 %v847, %v844
    %v1028 = vpack.c.b16 %v851, %v848
    %v1029 = vpack.c.b16 %v852, %v849
    %v1030 = vpack.c.b16 %v853, %v850
    %v1031 = vpack.c.b16 %v857, %v854
    %v1032 = vpack.c.b16 %v858, %v855
    %v1033 = vpack.c.b16 %v859, %v856
    %v1034 = vpack.c.b16 %v863, %v860
    %v1035 = vpack.c.b16 %v864, %v861
    %v1036 = vpack.c.b16 %v865, %v862
    %v1037 = vpack.c.b16 %v869, %v866
    %v1038 = vpack.c.b16 %v870, %v867
    %v1039 = vpack.c.b16 %v871, %v868
    %1208 = vmatprep.subr.bf16.mxu0 %v894
    %1209 = vmatpush1.bf16.msra.mxu0 %v893
    %1210 = vmatprep.subr.bf16.mxu0 %v891
    %1211 = vmatpush1.bf16.msra.mxu0 %v890
    %1212 = vmatprep.subr.bf16.mxu0 %v888
    %1213 = vmatpush1.bf16.msra.mxu0 %v887
    %1214 = vmatprep.subr.bf16.mxu0 %v885
    %1215 = vmatpush1.bf16.msra.mxu0 %v884
    %1216 = vmatprep.subr.bf16.mxu0 %v882
    %1217 = vmatpush1.bf16.msra.mxu0 %v881
    %1218 = vmatprep.subr.bf16.mxu0 %v879
    %1219 = vmatpush1.bf16.msra.mxu0 %v878
    %1220 = vmatprep.subr.bf16.mxu0 %v876
    %1221 = vmatpush1.bf16.msra.mxu0 %v875
    %1222 = vmatprep.subr.bf16.mxu0 %v873
    %1223 = vmatpush1.bf16.msra.mxu0 %v872
    %1224 = vmatprep.subr.bf16.mxu0 %v918
    %1225 = vmatpush2.bf16.msra.mxu0 %v917
    %1226 = vmatprep.subr.bf16.mxu0 %v915
    %1227 = vmatpush2.bf16.msra.mxu0 %v914
    %1228 = vmatprep.subr.bf16.mxu0 %v912
    %1229 = vmatpush2.bf16.msra.mxu0 %v911
    %1230 = vmatprep.subr.bf16.mxu0 %v909
    %1231 = vmatpush2.bf16.msra.mxu0 %v908
    %1232 = vmatprep.subr.bf16.mxu0 %v906
    %1233 = vmatpush2.bf16.msra.mxu0 %v905
    %1234 = vmatprep.subr.bf16.mxu0 %v903
    %1235 = vmatpush2.bf16.msra.mxu0 %v902
    %1236 = vmatprep.subr.bf16.mxu0 %v900
    %1237 = vmatpush2.bf16.msra.mxu0 %v899
    %1238 = vmatprep.subr.bf16.mxu0 %v897
    %1239 = vmatpush2.bf16.msra.mxu0 %v896
    %1240 = vmatprep.mubr.bf16.mxu0 %v299
    %1241 = vmatmul.mubr.bf16.gmra.mxu0 %v298
    %v1242 = vpop.f32.mrf.mxu0
    %v1243 = vadd.f32 %v275, %v1242
    %v1244 = vpop.f32.mrf.mxu0
    %v1245 = vadd.f32 %v279, %v1244
    %v1246 = vpop.f32.mrf.mxu0
    %v1247 = vpop.f32.mrf.mxu0
    %1248 = vdwg.mxu0
    %1249 = vmatprep.subr.bf16.mxu0 %v942
    %1250 = vmatpush1.bf16.msra.mxu0 %v941
    %1251 = vmatprep.subr.bf16.mxu0 %v939
    %1252 = vmatpush1.bf16.msra.mxu0 %v938
    %1253 = vmatprep.subr.bf16.mxu0 %v936
    %1254 = vmatpush1.bf16.msra.mxu0 %v935
    %1255 = vmatprep.subr.bf16.mxu0 %v933
    %1256 = vmatpush1.bf16.msra.mxu0 %v932
    %1257 = vmatprep.subr.bf16.mxu0 %v930
    %1258 = vmatpush1.bf16.msra.mxu0 %v929
    %1259 = vmatprep.subr.bf16.mxu0 %v927
    %1260 = vmatpush1.bf16.msra.mxu0 %v926
    %1261 = vmatprep.subr.bf16.mxu0 %v924
    %1262 = vmatpush1.bf16.msra.mxu0 %v923
    %1263 = vmatprep.subr.bf16.mxu0 %v921
    %1264 = vmatpush1.bf16.msra.mxu0 %v920
    %1265 = vmatprep.subr.bf16.mxu0 %v966
    %1266 = vmatpush2.bf16.msra.mxu0 %v965
    %1267 = vmatprep.subr.bf16.mxu0 %v963
    %1268 = vmatpush2.bf16.msra.mxu0 %v962
    %1269 = vmatprep.subr.bf16.mxu0 %v960
    %1270 = vmatpush2.bf16.msra.mxu0 %v959
    %1271 = vmatprep.subr.bf16.mxu0 %v957
    %1272 = vmatpush2.bf16.msra.mxu0 %v956
    %1273 = vmatprep.subr.bf16.mxu0 %v954
    %1274 = vmatpush2.bf16.msra.mxu0 %v953
    %1275 = vmatprep.subr.bf16.mxu0 %v951
    %1276 = vmatpush2.bf16.msra.mxu0 %v950
    %1277 = vmatprep.subr.bf16.mxu0 %v948
    %1278 = vmatpush2.bf16.msra.mxu0 %v947
    %1279 = vmatprep.subr.bf16.mxu0 %v945
    %1280 = vmatpush2.bf16.msra.mxu0 %v944
    %1281 = vmatprep.mubr.bf16.mxu0 %v301
    %1282 = vmatmul.mubr.bf16.gmra.mxu0 %v300
    %v1283 = vpop.f32.mrf.mxu0
    %v1284 = vadd.f32 %v1243, %v1283
    %v1285 = vpop.f32.mrf.mxu0
    %v1286 = vadd.f32 %v1245, %v1285
    %v1287 = vpop.f32.mrf.mxu0
    %v1288 = vpop.f32.mrf.mxu0
    %1289 = vdwg.mxu0
    %1290 = vmatprep.subr.bf16.mxu0 %v990
    %1291 = vmatpush1.bf16.msra.mxu0 %v989
    %1292 = vmatprep.subr.bf16.mxu0 %v987
    %1293 = vmatpush1.bf16.msra.mxu0 %v986
    %1294 = vmatprep.subr.bf16.mxu0 %v984
    %1295 = vmatpush1.bf16.msra.mxu0 %v983
    %1296 = vmatprep.subr.bf16.mxu0 %v981
    %1297 = vmatpush1.bf16.msra.mxu0 %v980
    %1298 = vmatprep.subr.bf16.mxu0 %v978
    %1299 = vmatpush1.bf16.msra.mxu0 %v977
    %1300 = vmatprep.subr.bf16.mxu0 %v975
    %1301 = vmatpush1.bf16.msra.mxu0 %v974
    %1302 = vmatprep.subr.bf16.mxu0 %v972
    %1303 = vmatpush1.bf16.msra.mxu0 %v971
    %1304 = vmatprep.subr.bf16.mxu0 %v969
    %1305 = vmatpush1.bf16.msra.mxu0 %v968
    %1306 = vmatprep.subr.bf16.mxu0 %v1014
    %1307 = vmatpush2.bf16.msra.mxu0 %v1013
    %1308 = vmatprep.subr.bf16.mxu0 %v1011
    %1309 = vmatpush2.bf16.msra.mxu0 %v1010
    %1310 = vmatprep.subr.bf16.mxu0 %v1008
    %1311 = vmatpush2.bf16.msra.mxu0 %v1007
    %1312 = vmatprep.subr.bf16.mxu0 %v1005
    %1313 = vmatpush2.bf16.msra.mxu0 %v1004
    %1314 = vmatprep.subr.bf16.mxu0 %v1002
    %1315 = vmatpush2.bf16.msra.mxu0 %v1001
    %1316 = vmatprep.subr.bf16.mxu0 %v999
    %1317 = vmatpush2.bf16.msra.mxu0 %v998
    %1318 = vmatprep.subr.bf16.mxu0 %v996
    %1319 = vmatpush2.bf16.msra.mxu0 %v995
    %1320 = vmatprep.subr.bf16.mxu0 %v993
    %1321 = vmatpush2.bf16.msra.mxu0 %v992
    %1322 = vmatprep.mubr.bf16.mxu0 %v303
    %1323 = vmatmul.mubr.bf16.gmra.mxu0 %v302
    %v1324 = vpop.f32.mrf.mxu0
    %v1325 = vadd.f32 %v1284, %v1324
    %v1326 = vpop.f32.mrf.mxu0
    %v1327 = vadd.f32 %v1286, %v1326
    %v1328 = vpop.f32.mrf.mxu0
    %v1329 = vpop.f32.mrf.mxu0
    %1330 = vdwg.mxu0
    %1331 = vmatprep.subr.bf16.mxu0 %v1038
    %1332 = vmatpush1.bf16.msra.mxu0 %v1037
    %1333 = vmatprep.subr.bf16.mxu0 %v1035
    %1334 = vmatpush1.bf16.msra.mxu0 %v1034
    %1335 = vmatprep.subr.bf16.mxu0 %v1032
    %1336 = vmatpush1.bf16.msra.mxu0 %v1031
    %1337 = vmatprep.subr.bf16.mxu0 %v1029
    %1338 = vmatpush1.bf16.msra.mxu0 %v1028
    %1339 = vmatprep.subr.bf16.mxu0 %v1026
    %1340 = vmatpush1.bf16.msra.mxu0 %v1025
    %1341 = vmatprep.subr.bf16.mxu0 %v1023
    %1342 = vmatpush1.bf16.msra.mxu0 %v1022
    %1343 = vmatprep.subr.bf16.mxu0 %v1020
    %1344 = vmatpush1.bf16.msra.mxu0 %v1019
    %1345 = vmatprep.subr.bf16.mxu0 %v1017
    %1346 = vmatpush1.bf16.msra.mxu0 %v1016
    %1347 = vmatprep.subr.bf16.mxu0 0
    %1348 = vmatpush2.bf16.msra.mxu0 0
    %1349 = vmatprep.subr.bf16.mxu0 0
    %1350 = vmatpush2.bf16.msra.mxu0 0
    %1351 = vmatprep.subr.bf16.mxu0 0
    %1352 = vmatpush2.bf16.msra.mxu0 0
    %1353 = vmatprep.subr.bf16.mxu0 0
    %1354 = vmatpush2.bf16.msra.mxu0 0
    %1355 = vmatprep.subr.bf16.mxu0 0
    %1356 = vmatpush2.bf16.msra.mxu0 0
    %1357 = vmatprep.subr.bf16.mxu0 0
    %1358 = vmatpush2.bf16.msra.mxu0 0
    %1359 = vmatprep.subr.bf16.mxu0 0
    %1360 = vmatpush2.bf16.msra.mxu0 0
    %1361 = vmatprep.subr.bf16.mxu0 0
    %1362 = vmatpush2.bf16.msra.mxu0 0
    %1363 = vmatprep.mubr.bf16.mxu0 0
    %1364 = vmatmul.mubr.bf16.gmra.mxu0 %v304
    %v1365 = vpop.f32.mrf.mxu0
    %v1366 = vadd.f32 %v1325, %v1365
    %v1367 = vpop.f32.mrf.mxu0
    %v1368 = vadd.f32 %v1327, %v1367
    %v1369 = vpop.f32.mrf.mxu0
    %v1370 = vpop.f32.mrf.mxu0
    %1371 = vdwg.mxu0
    %1372 = vmatprep.subr.bf16.mxu0 0
    %1373 = vmatpush1.bf16.msra.mxu0 %v895
    %1374 = vmatprep.subr.bf16.mxu0 0
    %1375 = vmatpush1.bf16.msra.mxu0 %v892
    %1376 = vmatprep.subr.bf16.mxu0 0
    %1377 = vmatpush1.bf16.msra.mxu0 %v889
    %1378 = vmatprep.subr.bf16.mxu0 0
    %1379 = vmatpush1.bf16.msra.mxu0 %v886
    %1380 = vmatprep.subr.bf16.mxu0 0
    %1381 = vmatpush1.bf16.msra.mxu0 %v883
    %1382 = vmatprep.subr.bf16.mxu0 0
    %1383 = vmatpush1.bf16.msra.mxu0 %v880
    %1384 = vmatprep.subr.bf16.mxu0 0
    %1385 = vmatpush1.bf16.msra.mxu0 %v877
    %1386 = vmatprep.subr.bf16.mxu0 0
    %1387 = vmatpush1.bf16.msra.mxu0 %v874
    %1388 = vmatprep.subr.bf16.mxu0 0
    %1389 = vmatpush2.bf16.msra.mxu0 %v919
    %1390 = vmatprep.subr.bf16.mxu0 0
    %1391 = vmatpush2.bf16.msra.mxu0 %v916
    %1392 = vmatprep.subr.bf16.mxu0 0
    %1393 = vmatpush2.bf16.msra.mxu0 %v913
    %1394 = vmatprep.subr.bf16.mxu0 0
    %1395 = vmatpush2.bf16.msra.mxu0 %v910
    %1396 = vmatprep.subr.bf16.mxu0 0
    %1397 = vmatpush2.bf16.msra.mxu0 %v907
    %1398 = vmatprep.subr.bf16.mxu0 0
    %1399 = vmatpush2.bf16.msra.mxu0 %v904
    %1400 = vmatprep.subr.bf16.mxu0 0
    %1401 = vmatpush2.bf16.msra.mxu0 %v901
    %1402 = vmatprep.subr.bf16.mxu0 0
    %1403 = vmatpush2.bf16.msra.mxu0 %v898
    %1404 = vmatprep.mubr.bf16.mxu0 %v299
    %1405 = vmatmul.mubr.bf16.gmra.mxu0 %v298
    %v1406 = vpop.f32.mrf.mxu0
    %v1407 = vadd.f32 %v283, %v1406
    %v1408 = vpop.f32.mrf.mxu0
    %v1409 = vpop.f32.mrf.mxu0
    %v1410 = vpop.f32.mrf.mxu0
    %1411 = vdwg.mxu0
    %1412 = vmatprep.subr.bf16.mxu0 0
    %1413 = vmatpush1.bf16.msra.mxu0 %v943
    %1414 = vmatprep.subr.bf16.mxu0 0
    %1415 = vmatpush1.bf16.msra.mxu0 %v940
    %1416 = vmatprep.subr.bf16.mxu0 0
    %1417 = vmatpush1.bf16.msra.mxu0 %v937
    %1418 = vmatprep.subr.bf16.mxu0 0
    %1419 = vmatpush1.bf16.msra.mxu0 %v934
    %1420 = vmatprep.subr.bf16.mxu0 0
    %1421 = vmatpush1.bf16.msra.mxu0 %v931
    %1422 = vmatprep.subr.bf16.mxu0 0
    %1423 = vmatpush1.bf16.msra.mxu0 %v928
    %1424 = vmatprep.subr.bf16.mxu0 0
    %1425 = vmatpush1.bf16.msra.mxu0 %v925
    %1426 = vmatprep.subr.bf16.mxu0 0
    %1427 = vmatpush1.bf16.msra.mxu0 %v922
    %1428 = vmatprep.subr.bf16.mxu0 0
    %1429 = vmatpush2.bf16.msra.mxu0 %v967
    %1430 = vmatprep.subr.bf16.mxu0 0
    %1431 = vmatpush2.bf16.msra.mxu0 %v964
    %1432 = vmatprep.subr.bf16.mxu0 0
    %1433 = vmatpush2.bf16.msra.mxu0 %v961
    %1434 = vmatprep.subr.bf16.mxu0 0
    %1435 = vmatpush2.bf16.msra.mxu0 %v958
    %1436 = vmatprep.subr.bf16.mxu0 0
    %1437 = vmatpush2.bf16.msra.mxu0 %v955
    %1438 = vmatprep.subr.bf16.mxu0 0
    %1439 = vmatpush2.bf16.msra.mxu0 %v952
    %1440 = vmatprep.subr.bf16.mxu0 0
    %1441 = vmatpush2.bf16.msra.mxu0 %v949
    %1442 = vmatprep.subr.bf16.mxu0 0
    %1443 = vmatpush2.bf16.msra.mxu0 %v946
    %1444 = vmatprep.mubr.bf16.mxu0 %v301
    %1445 = vmatmul.mubr.bf16.gmra.mxu0 %v300
    %v1446 = vpop.f32.mrf.mxu0
    %v1447 = vadd.f32 %v1407, %v1446
    %v1448 = vpop.f32.mrf.mxu0
    %v1449 = vpop.f32.mrf.mxu0
    %v1450 = vpop.f32.mrf.mxu0
    %1451 = vdwg.mxu0
    %1452 = vmatprep.subr.bf16.mxu0 0
    %1453 = vmatpush1.bf16.msra.mxu0 %v991
    %1454 = vmatprep.subr.bf16.mxu0 0
    %1455 = vmatpush1.bf16.msra.mxu0 %v988
    %1456 = vmatprep.subr.bf16.mxu0 0
    %1457 = vmatpush1.bf16.msra.mxu0 %v985
    %1458 = vmatprep.subr.bf16.mxu0 0
    %1459 = vmatpush1.bf16.msra.mxu0 %v982
    %1460 = vmatprep.subr.bf16.mxu0 0
    %1461 = vmatpush1.bf16.msra.mxu0 %v979
    %1462 = vmatprep.subr.bf16.mxu0 0
    %1463 = vmatpush1.bf16.msra.mxu0 %v976
    %1464 = vmatprep.subr.bf16.mxu0 0
    %1465 = vmatpush1.bf16.msra.mxu0 %v973
    %1466 = vmatprep.subr.bf16.mxu0 0
    %1467 = vmatpush1.bf16.msra.mxu0 %v970
    %1468 = vmatprep.subr.bf16.mxu0 0
    %1469 = vmatpush2.bf16.msra.mxu0 %v1015
    %1470 = vmatprep.subr.bf16.mxu0 0
    %1471 = vmatpush2.bf16.msra.mxu0 %v1012
    %1472 = vmatprep.subr.bf16.mxu0 0
    %1473 = vmatpush2.bf16.msra.mxu0 %v1009
    %1474 = vmatprep.subr.bf16.mxu0 0
    %1475 = vmatpush2.bf16.msra.mxu0 %v1006
    %1476 = vmatprep.subr.bf16.mxu0 0
    %1477 = vmatpush2.bf16.msra.mxu0 %v1003
    %1478 = vmatprep.subr.bf16.mxu0 0
    %1479 = vmatpush2.bf16.msra.mxu0 %v1000
    %1480 = vmatprep.subr.bf16.mxu0 0
    %1481 = vmatpush2.bf16.msra.mxu0 %v997
    %1482 = vmatprep.subr.bf16.mxu0 0
    %1483 = vmatpush2.bf16.msra.mxu0 %v994
    %1484 = vmatprep.mubr.bf16.mxu0 %v303
    %1485 = vmatmul.mubr.bf16.gmra.mxu0 %v302
    %v1486 = vpop.f32.mrf.mxu0
    %v1487 = vadd.f32 %v1447, %v1486
    %v1488 = vpop.f32.mrf.mxu0
    %v1489 = vpop.f32.mrf.mxu0
    %v1490 = vpop.f32.mrf.mxu0
    %1491 = vdwg.mxu0
    %1492 = vmatprep.subr.bf16.mxu0 0
    %1493 = vmatpush1.bf16.msra.mxu0 %v1039
    %1494 = vmatprep.subr.bf16.mxu0 0
    %1495 = vmatpush1.bf16.msra.mxu0 %v1036
    %1496 = vmatprep.subr.bf16.mxu0 0
    %1497 = vmatpush1.bf16.msra.mxu0 %v1033
    %1498 = vmatprep.subr.bf16.mxu0 0
    %1499 = vmatpush1.bf16.msra.mxu0 %v1030
    %1500 = vmatprep.subr.bf16.mxu0 0
    %1501 = vmatpush1.bf16.msra.mxu0 %v1027
    %1502 = vmatprep.subr.bf16.mxu0 0
    %1503 = vmatpush1.bf16.msra.mxu0 %v1024
    %1504 = vmatprep.subr.bf16.mxu0 0
    %1505 = vmatpush1.bf16.msra.mxu0 %v1021
    %1506 = vmatprep.subr.bf16.mxu0 0
    %1507 = vmatpush1.bf16.msra.mxu0 %v1018
    %1508 = vmatprep.subr.bf16.mxu0 0
    %1509 = vmatpush2.bf16.msra.mxu0 0
    %1510 = vmatprep.subr.bf16.mxu0 0
    %1511 = vmatpush2.bf16.msra.mxu0 0
    %1512 = vmatprep.subr.bf16.mxu0 0
    %1513 = vmatpush2.bf16.msra.mxu0 0
    %1514 = vmatprep.subr.bf16.mxu0 0
    %1515 = vmatpush2.bf16.msra.mxu0 0
    %1516 = vmatprep.subr.bf16.mxu0 0
    %1517 = vmatpush2.bf16.msra.mxu0 0
    %1518 = vmatprep.subr.bf16.mxu0 0
    %1519 = vmatpush2.bf16.msra.mxu0 0
    %1520 = vmatprep.subr.bf16.mxu0 0
    %1521 = vmatpush2.bf16.msra.mxu0 0
    %1522 = vmatprep.subr.bf16.mxu0 0
    %1523 = vmatpush2.bf16.msra.mxu0 0
    %1524 = vmatprep.mubr.bf16.mxu0 0
    %1525 = vmatmul.mubr.bf16.gmra.mxu0 %v304
    %v1526 = vpop.f32.mrf.mxu0
    %v1527 = vadd.f32 %v1487, %v1526
    %v1528 = vpop.f32.mrf.mxu0
    %v1529 = vpop.f32.mrf.mxu0
    %v1530 = vpop.f32.mrf.mxu0
    %1531 = vdwg.mxu0
    %v1532 = vmax.f32 %v1366, 0.0
    %v1533 = vmax.f32 %v1368, 0.0
    %v1534 = vmax.f32 %v1527, 0.0
    %v1535 = vpack.c.bf16 %v1532, %v1532
    %v1536 = vpack.c.bf16 %v1533, %v1533
    %v1537 = vpack.c.bf16 %v1534, %v1534
    %v1538 = vld [vmem:[%s3] sm:$0xf]
    %v1539 = vld [vmem:[%s3 + $0x4] sm:$0xf]
    %v1540 = vld [vmem:[%s3 + $0x8] sm:$0xf]
    %v1541 = vld [vmem:[%s3 + $0xc] sm:$0xf]
    %v1542 = vld [vmem:[%s3 + $0x10] sm:$0xf]
    %v1543 = vld [vmem:[%s3 + $0x14] sm:$0xf]
    %v1544 = vld [vmem:[%s3 + $0x18] sm:$0xf]
    %v1545 = vld [vmem:[%s3 + $0x1c] sm:$0xf]
    %v1546 = vld [vmem:[%s3 + $0x20] sm:$0xf]
    %v1547 = vld [vmem:[%s3 + $0x24] sm:$0xf]
    %v1548 = vld [vmem:[%s3 + $0x28] sm:$0xf]
    %v1549 = vld [vmem:[%s3 + $0x2c] sm:$0xf]
    %v1550 = vld [vmem:[%s3 + $0x30] sm:$0xf]
    %v1551 = vld [vmem:[%s3 + $0x34] sm:$0xf]
    %v1552 = vld [vmem:[%s3 + $0x38] sm:$0xf]
    %v1553 = vld [vmem:[%s3 + $0x3c] sm:$0xf]
    %v1554 = vld [vmem:[%s3 + $0x40] sm:$0xf]
    %v1555 = vld [vmem:[%s3 + $0x44] sm:$0xf]
    %v1556 = vld [vmem:[%s3 + $0x48] sm:$0xf]
    %v1557 = vld [vmem:[%s3 + $0x4c] sm:$0xf]
    %v1558 = vld [vmem:[%s3 + $0x50] sm:$0xf]
    %v1559 = vld [vmem:[%s3 + $0x54] sm:$0xf]
    %v1560 = vld [vmem:[%s3 + $0x58] sm:$0xf]
    %v1561 = vld [vmem:[%s3 + $0x5c] sm:$0xf]
    %v1562 = vld [vmem:[%s3 + $0x60] sm:$0xf]
    %v1563 = vld [vmem:[%s3 + $0x64] sm:$0xf]
    %v1564 = vld [vmem:[%s3 + $0x68] sm:$0xf]
    %v1565 = vld [vmem:[%s3 + $0x6c] sm:$0xf]
    %v1566 = vld [vmem:[%s3 + $0x70] sm:$0xf]
    %v1567 = vld [vmem:[%s3 + $0x74] sm:$0xf]
    %v1568 = vld [vmem:[%s3 + $0x78] sm:$0xf]
    %v1569 = vld [vmem:[%s3 + $0x7c] sm:$0xf]
    %v1570 = vld [vmem:[%s3 + $0x80] sm:$0xf]
    %v1571 = vld [vmem:[%s3 + $0x84] sm:$0xf]
    %v1572 = vld [vmem:[%s3 + $0x88] sm:$0xf]
    %v1573 = vld [vmem:[%s3 + $0x8c] sm:$0xf]
    %v1574 = vld [vmem:[%s3 + $0x90] sm:$0xf]
    %v1575 = vld [vmem:[%s3 + $0x94] sm:$0xf]
    %v1576 = vld [vmem:[%s3 + $0x98] sm:$0xf]
    %v1577 = vld [vmem:[%s3 + $0x9c] sm:$0xf]
    %v1578 = vld [vmem:[%s3 + $0xa0] sm:$0xf]
    %v1579 = vld [vmem:[%s3 + $0xa4] sm:$0xf]
    %v1580 = vld [vmem:[%s3 + $0xa8] sm:$0xf]
    %v1581 = vld [vmem:[%s3 + $0xac] sm:$0xf]
    %v1582 = vld [vmem:[%s3 + $0xb0] sm:$0xf]
    %v1583 = vld [vmem:[%s3 + $0xb4] sm:$0xf]
    %v1584 = vld [vmem:[%s3 + $0xb8] sm:$0xf]
    %v1585 = vld [vmem:[%s3 + $0xbc] sm:$0xf]
    %v1586 = vld [vmem:[%s4] sm:$0x1]
    %v1588 = vlaneseq
    %v1589 = vshrl.u32 %v1588, 7
    %v1590 = vsub.s32 0, %v1589
    %v1591 = vrot.slane %v1586, %v1590
    %v1641 = vunpack.c.l.b16 %v1538
    %v1642 = vunpack.c.l.b16 %v1539
    %v1643 = vunpack.c.l.b16 %v1540
    %v1644 = vunpack.c.l.b16 %v1541
    %v1645 = vunpack.c.l.b16 %v1542
    %v1646 = vunpack.c.l.b16 %v1543
    %v1647 = vunpack.c.l.b16 %v1544
    %v1648 = vunpack.c.l.b16 %v1545
    %v1649 = vunpack.c.l.b16 %v1546
    %v1650 = vunpack.c.l.b16 %v1547
    %v1651 = vunpack.c.l.b16 %v1548
    %v1652 = vunpack.c.l.b16 %v1549
    %v1653 = vunpack.c.l.b16 %v1550
    %v1654 = vunpack.c.l.b16 %v1551
    %v1655 = vunpack.c.l.b16 %v1552
    %v1656 = vunpack.c.l.b16 %v1553
    %v1657 = vunpack.c.l.b16 %v1554
    %v1658 = vunpack.c.l.b16 %v1555
    %v1659 = vunpack.c.l.b16 %v1556
    %v1660 = vunpack.c.l.b16 %v1557
    %v1661 = vunpack.c.l.b16 %v1558
    %v1662 = vunpack.c.l.b16 %v1559
    %v1663 = vunpack.c.l.b16 %v1560
    %v1664 = vunpack.c.l.b16 %v1561
    %v1665 = vunpack.c.l.b16 %v1562
    %v1666 = vunpack.c.l.b16 %v1563
    %v1667 = vunpack.c.l.b16 %v1564
    %v1668 = vunpack.c.l.b16 %v1565
    %v1669 = vunpack.c.l.b16 %v1566
    %v1670 = vunpack.c.l.b16 %v1567
    %v1671 = vunpack.c.l.b16 %v1568
    %v1672 = vunpack.c.l.b16 %v1569
    %v1673 = vunpack.c.l.b16 %v1570
    %v1674 = vunpack.c.l.b16 %v1571
    %v1675 = vunpack.c.l.b16 %v1572
    %v1676 = vunpack.c.l.b16 %v1573
    %v1677 = vunpack.c.l.b16 %v1574
    %v1678 = vunpack.c.l.b16 %v1575
    %v1679 = vunpack.c.l.b16 %v1576
    %v1680 = vunpack.c.l.b16 %v1577
    %v1681 = vunpack.c.l.b16 %v1578
    %v1682 = vunpack.c.l.b16 %v1579
    %v1683 = vunpack.c.l.b16 %v1580
    %v1684 = vunpack.c.l.b16 %v1581
    %v1685 = vunpack.c.l.b16 %v1582
    %v1686 = vunpack.c.l.b16 %v1583
    %v1687 = vunpack.c.l.b16 %v1584
    %v1688 = vunpack.c.l.b16 %v1585
    %v1689 = vpack.c.b16 %v1642, %v1641
    %v1690 = vpack.c.b16 %v1644, %v1643
    %v1691 = vpack.c.b16 %v1646, %v1645
    %v1692 = vpack.c.b16 %v1648, %v1647
    %v1693 = vpack.c.b16 %v1650, %v1649
    %v1694 = vpack.c.b16 %v1652, %v1651
    %v1695 = vpack.c.b16 %v1654, %v1653
    %v1696 = vpack.c.b16 %v1656, %v1655
    %v1697 = vpack.c.b16 %v1658, %v1657
    %v1698 = vpack.c.b16 %v1660, %v1659
    %v1699 = vpack.c.b16 %v1662, %v1661
    %v1700 = vpack.c.b16 %v1664, %v1663
    %v1701 = vpack.c.b16 %v1666, %v1665
    %v1702 = vpack.c.b16 %v1668, %v1667
    %v1703 = vpack.c.b16 %v1670, %v1669
    %v1704 = vpack.c.b16 %v1672, %v1671
    %v1705 = vpack.c.b16 %v1674, %v1673
    %v1706 = vpack.c.b16 %v1676, %v1675
    %v1707 = vpack.c.b16 %v1678, %v1677
    %v1708 = vpack.c.b16 %v1680, %v1679
    %v1709 = vpack.c.b16 %v1682, %v1681
    %v1710 = vpack.c.b16 %v1684, %v1683
    %v1711 = vpack.c.b16 %v1686, %v1685
    %v1712 = vpack.c.b16 %v1688, %v1687
    %1737 = vmatprep.subr.bf16.mxu0 0
    %1738 = vmatpush1.bf16.msra.mxu0 %v1696
    %1739 = vmatprep.subr.bf16.mxu0 0
    %1740 = vmatpush1.bf16.msra.mxu0 %v1695
    %1741 = vmatprep.subr.bf16.mxu0 0
    %1742 = vmatpush1.bf16.msra.mxu0 %v1694
    %1743 = vmatprep.subr.bf16.mxu0 0
    %1744 = vmatpush1.bf16.msra.mxu0 %v1693
    %1745 = vmatprep.subr.bf16.mxu0 0
    %1746 = vmatpush1.bf16.msra.mxu0 %v1692
    %1747 = vmatprep.subr.bf16.mxu0 0
    %1748 = vmatpush1.bf16.msra.mxu0 %v1691
    %1749 = vmatprep.subr.bf16.mxu0 0
    %1750 = vmatpush1.bf16.msra.mxu0 %v1690
    %1751 = vmatprep.subr.bf16.mxu0 0
    %1752 = vmatpush1.bf16.msra.mxu0 %v1689
    %1753 = vmatprep.subr.bf16.mxu0 0
    %1754 = vmatpush2.bf16.msra.mxu0 %v1704
    %1755 = vmatprep.subr.bf16.mxu0 0
    %1756 = vmatpush2.bf16.msra.mxu0 %v1703
    %1757 = vmatprep.subr.bf16.mxu0 0
    %1758 = vmatpush2.bf16.msra.mxu0 %v1702
    %1759 = vmatprep.subr.bf16.mxu0 0
    %1760 = vmatpush2.bf16.msra.mxu0 %v1701
    %1761 = vmatprep.subr.bf16.mxu0 0
    %1762 = vmatpush2.bf16.msra.mxu0 %v1700
    %1763 = vmatprep.subr.bf16.mxu0 0
    %1764 = vmatpush2.bf16.msra.mxu0 %v1699
    %1765 = vmatprep.subr.bf16.mxu0 0
    %1766 = vmatpush2.bf16.msra.mxu0 %v1698
    %1767 = vmatprep.subr.bf16.mxu0 0
    %1768 = vmatpush2.bf16.msra.mxu0 %v1697
    %1769 = vmatprep.mubr.bf16.mxu0 %v1536
    %1770 = vmatmul.mubr.bf16.gmra.mxu0 %v1535
    %v1771 = vpop.f32.mrf.mxu0
    %v1772 = vadd.f32 %v1591, %v1771
    %v1773 = vpop.f32.mrf.mxu0
    %v1774 = vpop.f32.mrf.mxu0
    %v1775 = vpop.f32.mrf.mxu0
    %1776 = vdwg.mxu0
    %1777 = vmatprep.subr.bf16.mxu0 0
    %1778 = vmatpush1.bf16.msra.mxu0 %v1712
    %1779 = vmatprep.subr.bf16.mxu0 0
    %1780 = vmatpush1.bf16.msra.mxu0 %v1711
    %1781 = vmatprep.subr.bf16.mxu0 0
    %1782 = vmatpush1.bf16.msra.mxu0 %v1710
    %1783 = vmatprep.subr.bf16.mxu0 0
    %1784 = vmatpush1.bf16.msra.mxu0 %v1709
    %1785 = vmatprep.subr.bf16.mxu0 0
    %1786 = vmatpush1.bf16.msra.mxu0 %v1708
    %1787 = vmatprep.subr.bf16.mxu0 0
    %1788 = vmatpush1.bf16.msra.mxu0 %v1707
    %1789 = vmatprep.subr.bf16.mxu0 0
    %1790 = vmatpush1.bf16.msra.mxu0 %v1706
    %1791 = vmatprep.subr.bf16.mxu0 0
    %1792 = vmatpush1.bf16.msra.mxu0 %v1705
    %1793 = vmatprep.subr.bf16.mxu0 0
    %1794 = vmatpush2.bf16.msra.mxu0 0
    %1795 = vmatprep.subr.bf16.mxu0 0
    %1796 = vmatpush2.bf16.msra.mxu0 0
    %1797 = vmatprep.subr.bf16.mxu0 0
    %1798 = vmatpush2.bf16.msra.mxu0 0
    %1799 = vmatprep.subr.bf16.mxu0 0
    %1800 = vmatpush2.bf16.msra.mxu0 0
    %1801 = vmatprep.subr.bf16.mxu0 0
    %1802 = vmatpush2.bf16.msra.mxu0 0
    %1803 = vmatprep.subr.bf16.mxu0 0
    %1804 = vmatpush2.bf16.msra.mxu0 0
    %1805 = vmatprep.subr.bf16.mxu0 0
    %1806 = vmatpush2.bf16.msra.mxu0 0
    %1807 = vmatprep.subr.bf16.mxu0 0
    %1808 = vmatpush2.bf16.msra.mxu0 0
    %1809 = vmatprep.mubr.bf16.mxu0 0
    %1810 = vmatmul.mubr.bf16.gmra.mxu0 %v1537
    %v1811 = vpop.f32.mrf.mxu0
    %v1812 = vadd.f32 %v1772, %v1811
    %v1813 = vpop.f32.mrf.mxu0
    %v1814 = vpop.f32.mrf.mxu0
    %v1815 = vpop.f32.mrf.mxu0
    %1816 = vdwg.mxu0
    %v1817 = vmax.f32 %v1812, 0.0
    %v1818 = vpack.c.bf16 %v1817, %v1817
    %v1819 = vld [vmem:[%s5] sm:$0xf]
    %v1820 = vld [vmem:[%s5 + $0x4] sm:$0xf]
    %v1821 = vld [vmem:[%s5 + $0x8] sm:$0xf]
    %v1822 = vld [vmem:[%s5 + $0xc] sm:$0xf]
    %v1823 = vld [vmem:[%s5 + $0x10] sm:$0xf]
    %v1824 = vld [vmem:[%s5 + $0x14] sm:$0xf]
    %v1825 = vld [vmem:[%s5 + $0x18] sm:$0xf]
    %v1826 = vld [vmem:[%s5 + $0x1c] sm:$0xf]
    %v1827 = vld [vmem:[%s5 + $0x20] sm:$0xf]
    %v1828 = vld [vmem:[%s5 + $0x24] sm:$0xf]
    %v1829 = vld [vmem:[%s5 + $0x28] sm:$0xf]
    %v1830 = vld [vmem:[%s5 + $0x2c] sm:$0xf]
    %v1831 = vld [vmem:[%s5 + $0x30] sm:$0xf]
    %v1832 = vld [vmem:[%s5 + $0x34] sm:$0xf]
    %v1833 = vld [vmem:[%s5 + $0x38] sm:$0xf]
    %v1834 = vld [vmem:[%s5 + $0x3c] sm:$0xf]
    %v1835 = vld [vmem:[%s6] sm:$0x1]
    %v1837 = vlaneseq
    %v1838 = vshrl.u32 %v1837, 7
    %v1839 = vsub.s32 0, %v1838
    %v1840 = vrot.slane %v1835, %v1839
    %v1858 = vunpack.c.l.b16 %v1819
    %v1859 = vunpack.c.l.b16 %v1820
    %v1860 = vunpack.c.l.b16 %v1821
    %v1861 = vunpack.c.l.b16 %v1822
    %v1862 = vunpack.c.l.b16 %v1823
    %v1863 = vunpack.c.l.b16 %v1824
    %v1864 = vunpack.c.l.b16 %v1825
    %v1865 = vunpack.c.l.b16 %v1826
    %v1866 = vunpack.c.l.b16 %v1827
    %v1867 = vunpack.c.l.b16 %v1828
    %v1868 = vunpack.c.l.b16 %v1829
    %v1869 = vunpack.c.l.b16 %v1830
    %v1870 = vunpack.c.l.b16 %v1831
    %v1871 = vunpack.c.l.b16 %v1832
    %v1872 = vunpack.c.l.b16 %v1833
    %v1873 = vunpack.c.l.b16 %v1834
    %v1874 = vpack.c.b16 %v1859, %v1858
    %v1875 = vpack.c.b16 %v1861, %v1860
    %v1876 = vpack.c.b16 %v1863, %v1862
    %v1877 = vpack.c.b16 %v1865, %v1864
    %v1878 = vpack.c.b16 %v1867, %v1866
    %v1879 = vpack.c.b16 %v1869, %v1868
    %v1880 = vpack.c.b16 %v1871, %v1870
    %v1881 = vpack.c.b16 %v1873, %v1872
    %1890 = vmatprep.subr.bf16.mxu0 0
    %1891 = vmatpush1.bf16.msra.mxu0 %v1881
    %1892 = vmatprep.subr.bf16.mxu0 0
    %1893 = vmatpush1.bf16.msra.mxu0 %v1880
    %1894 = vmatprep.subr.bf16.mxu0 0
    %1895 = vmatpush1.bf16.msra.mxu0 %v1879
    %1896 = vmatprep.subr.bf16.mxu0 0
    %1897 = vmatpush1.bf16.msra.mxu0 %v1878
    %1898 = vmatprep.subr.bf16.mxu0 0
    %1899 = vmatpush1.bf16.msra.mxu0 %v1877
    %1900 = vmatprep.subr.bf16.mxu0 0
    %1901 = vmatpush1.bf16.msra.mxu0 %v1876
    %1902 = vmatprep.subr.bf16.mxu0 0
    %1903 = vmatpush1.bf16.msra.mxu0 %v1875
    %1904 = vmatprep.subr.bf16.mxu0 0
    %1905 = vmatpush1.bf16.msra.mxu0 %v1874
    %1906 = vmatprep.subr.bf16.mxu0 0
    %1907 = vmatpush2.bf16.msra.mxu0 0
    %1908 = vmatprep.subr.bf16.mxu0 0
    %1909 = vmatpush2.bf16.msra.mxu0 0
    %1910 = vmatprep.subr.bf16.mxu0 0
    %1911 = vmatpush2.bf16.msra.mxu0 0
    %1912 = vmatprep.subr.bf16.mxu0 0
    %1913 = vmatpush2.bf16.msra.mxu0 0
    %1914 = vmatprep.subr.bf16.mxu0 0
    %1915 = vmatpush2.bf16.msra.mxu0 0
    %1916 = vmatprep.subr.bf16.mxu0 0
    %1917 = vmatpush2.bf16.msra.mxu0 0
    %1918 = vmatprep.subr.bf16.mxu0 0
    %1919 = vmatpush2.bf16.msra.mxu0 0
    %1920 = vmatprep.subr.bf16.mxu0 0
    %1921 = vmatpush2.bf16.msra.mxu0 0
    %1922 = vmatprep.mubr.bf16.mxu0 0
    %1923 = vmatmul.mubr.bf16.gmra.mxu0 %v1818
    %v1924 = vpop.f32.mrf.mxu0
    %v1925 = vadd.f32 %v1840, %v1924
    %v1926 = vpop.f32.mrf.mxu0
    %v1927 = vpop.f32.mrf.mxu0
    %v1928 = vpop.f32.mrf.mxu0
    %1929 = vdwg.mxu0
    %v1930 = vlaneseq
    %v1931 = vand.u32 %v1930, 127
    %vm1932 = vcmp.lt.s32.totalorder %v1931, 10
    %v1933 = vsel %vm1932, %v1925, -inf
    %1934 = vmax.xlane.f32.xlu0 %v1933
    %v1935 = vpop.xlane.xlu0 %1934
    %v1936 = vsub.f32 %v1933, %v1935
    %v1937 = vmul.f32 %v1936, 1.442695
    %v1938 = vpow.pop %v1937
    %1939 = vadd.xlane.f32.xlu0 %v1938
    %v1940 = vpop.xlane.xlu0 %1939
    %v1941 = vlog2.pop %v1940
    %v1942 = vmul.f32 %v1941, 0.6931472
    %v1943 = vsub.f32 %v1936, %v1942
    %v1944 = vsel %vm1932, %v1943, 0.0
    %1945 = vst [vmem:[#allocation5] sm:$0xff] %v1944
    // Predicated region
    $region34: #{fcnn_forward.1} parent=1 // pred_check
      _
    $region35: #{fcnn_forward.1} parent=1 // pred_check_branch
      %1947 = sbr.rel (0) target = $region37
    $region36: #{fcnn_forward.1} parent=1 // pred_region
      %s1949 = ssub.s32 128, 128
      %1950 = vsyncadd [#allocation4], %s1949
      %s1952 = sshll.u32 [#allocation5], 4
      %s1953 = int_to_ptr.vmem [resolvable:$true] %s1952
      %1955 = dma.vmem_to_hbm [thread:$0]  %s1953, 128, %s7, [#allocation4]
    $region37: #{fcnn_forward.1} parent=1 // pred_fallthru
      _
    // Predicated region
    $region38: #{fcnn_forward.1} parent=1 // pred_check
      _
    $region39: #{fcnn_forward.1} parent=1 // pred_check_branch
      %1957 = sbr.rel (0) target = $region41
    $region40: #{fcnn_forward.1} parent=1 // pred_region
      %1958 = dma.done [#allocation4], 128
    $region41: #{fcnn_forward.1} parent=1 // pred_fallthru
      _
    %1959 = vsyncpa [#allocation3], 1
    %1960 = vsyncpa [#allocation4], 1

</llo_original>
